<compile_context>
chip_gen: v6e
topology: v6e:2x2x1
jax: 0.10.0
libtpu: 0.0.40
codegen_flags: <defaults>
</compile_context>

<pallas_src>
import jax
import jax.numpy as jnp
from jax.experimental import pallas as pl
from jax.experimental.pallas import tpu as pltpu

EPS = 1e-5


def _round_up(n, m):
    return ((n + m - 1) // m) * m


def _vmem_limit_bytes(tb, feat_dims):
    worst = 0
    for fin, fout in zip(feat_dims[:-1], feat_dims[1:]):
        act = 2 * tb * (fin + fout) * 4        # double-buffered activation blocks (f32)
        wgt = 2 * fin * fout * 2               # bf16 weights (conservatively x2)
        aux = 2 * (4 * fout * 4 + tb * 4 + 2 * fout * 4)
        worst = max(worst, act + wgt + aux)
    return int(min(48 * 1024 * 1024, max(16 * 1024 * 1024, 4 * worst)))


# ---------------- kernels ----------------

def _linear_stats_kernel(x_ref, w_ref, h_ref, stats_ref):
    # fc1: x @ W1t (bf16 operands, f32 accumulate) + per-tile batch sum / sum-of-squares
    xb = x_ref[...].astype(jnp.bfloat16)
    h = jnp.dot(xb, w_ref[...], preferred_element_type=jnp.float32)
    h_ref[...] = h
    s = jnp.sum(h, axis=0, keepdims=True)
    q = jnp.sum(h * h, axis=0, keepdims=True)
    stats_ref[...] = jnp.concatenate([s, q], axis=0)[None]


def _bn_relu_linear_stats_kernel(h_ref, scale_ref, shift_ref, mask_ref, w_ref,
                                 h_out_ref, stats_ref):
    # normalize previous layer's pre-activation with full-batch scale/shift, ReLU,
    # zero padded rows, then next layer's matmul + per-tile stats.
    h = h_ref[...]
    a = jnp.maximum(h * scale_ref[...] + shift_ref[...], 0.0) * mask_ref[...]
    hn = jnp.dot(a.astype(jnp.bfloat16), w_ref[...],
                 preferred_element_type=jnp.float32)
    h_out_ref[...] = hn
    s = jnp.sum(hn, axis=0, keepdims=True)
    q = jnp.sum(hn * hn, axis=0, keepdims=True)
    stats_ref[...] = jnp.concatenate([s, q], axis=0)[None]


def _bn_relu_head_kernel(h_ref, scale_ref, shift_ref, w4_ref, b4_ref, out_ref):
    # bn3 + relu, then fc4 as VPU broadcast-mul + lane reduction (out_features == 1)
    h = h_ref[...]
    a = jnp.maximum(h * scale_ref[...] + shift_ref[...], 0.0)
    y = jnp.sum(a * w4_ref[...], axis=-1, keepdims=True) + b4_ref[0]
    out_ref[...] = y


# ---------------- wrapper ----------------

def _bn_affine(stats, gamma, beta, n):
    """Per-tile (sum, sumsq) -> full-batch BN scale/shift (training-mode, biased var)."""
    sums = jnp.sum(stats, axis=0)                       # (2, F)
    mean = sums[0] / n
    var = jnp.maximum(sums[1] / n - mean * mean, 0.0)   # single-pass variance
    inv = jax.lax.rsqrt(var + EPS)
    scale = (gamma * inv).astype(jnp.float32)           # (1, F)
    shift = (beta - mean * scale).astype(jnp.float32)   # (1, F)
    return scale, shift


def simplenet_3bn_forward(x, params, *, batch_tile=128):
    """x: (B, number_of_features) float32. Returns (B, 1) float32."""
    B, F0 = x.shape
    w1t = params["w1"].T.astype(jnp.bfloat16)            # (F0, F1) -- pre-transposed once
    w2t = params["w2"].T.astype(jnp.bfloat16)            # (F1, F2)
    w3t = params["w3"].T.astype(jnp.bfloat16)            # (F2, F3)
    F1, F2, F3 = w1t.shape[1], w2t.shape[1], w3t.shape[1]
    w4r = params["w4"].reshape(1, F3).astype(jnp.float32)  # fc4 weight row (VPU path)
    b4 = params["b4"].reshape(1).astype(jnp.float32)        # scalar bias -> SMEM

    tb = _round_up(min(batch_tile, B), 8)
    B_pad = _round_up(B, tb)
    nt = B_pad // tb
    cparams = pltpu.CompilerParams(
        dimension_semantics=("parallel",),
        vmem_limit_bytes=_vmem_limit_bytes(tb, (F0, F1, F2, F3)))

    if B_pad != B:
        x_p = jnp.zeros((B_pad, F0), jnp.float32).at[:B].set(x.astype(jnp.float32))
    else:
        x_p = x.astype(jnp.float32)
    mask = (jnp.arange(B_pad) < B).astype(jnp.float32).reshape(B_pad, 1)

    # ---- layer 1: fc1 + batch statistics ----
    h1, s1 = pl.pallas_call(
        _linear_stats_kernel,
        grid=(nt,),
        in_specs=[pl.BlockSpec((tb, F0), lambda i: (i, 0)),
                  pl.BlockSpec((F0, F1), lambda i: (0, 0))],
        out_specs=(pl.BlockSpec((tb, F1), lambda i: (i, 0)),
                   pl.BlockSpec((1, 2, F1), lambda i: (i, 0, 0))),
        out_shape=(jax.ShapeDtypeStruct((B_pad, F1), jnp.float32),
                   jax.ShapeDtypeStruct((nt, 2, F1), jnp.float32)),
        compiler_params=cparams,
    )(x_p, w1t)
    sc1, sh1 = _bn_affine(s1, params["g1"], params["b1"], B)

    # ---- layers 2 & 3: bn+relu of previous pre-activation, next matmul, stats ----
    def mid(h, sc, sh, wt, fin, fout):
        return pl.pallas_call(
            _bn_relu_linear_stats_kernel,
            grid=(nt,),
            in_specs=[pl.BlockSpec((tb, fin), lambda i: (i, 0)),
                      pl.BlockSpec((1, fin), lambda i: (0, 0)),
                      pl.BlockSpec((1, fin), lambda i: (0, 0)),
                      pl.BlockSpec((tb, 1), lambda i: (i, 0)),
                      pl.BlockSpec((fin, fout), lambda i: (0, 0))],
            out_specs=(pl.BlockSpec((tb, fout), lambda i: (i, 0)),
                       pl.BlockSpec((1, 2, fout), lambda i: (i, 0, 0))),
            out_shape=(jax.ShapeDtypeStruct((B_pad, fout), jnp.float32),
                       jax.ShapeDtypeStruct((nt, 2, fout), jnp.float32)),
            compiler_params=cparams,
        )(h, sc, sh, mask, wt)

    h2, s2 = mid(h1, sc1, sh1, w2t, F1, F2)
    sc2, sh2 = _bn_affine(s2, params["g2"], params["b2"], B)
    h3, s3 = mid(h2, sc2, sh2, w3t, F2, F3)
    sc3, sh3 = _bn_affine(s3, params["g3"], params["b3"], B)

    # ---- head: bn3 + relu + fc4 ----
    out_p = pl.pallas_call(
        _bn_relu_head_kernel,
        grid=(nt,),
        in_specs=[pl.BlockSpec((tb, F3), lambda i: (i, 0)),
                  pl.BlockSpec((1, F3), lambda i: (0, 0)),
                  pl.BlockSpec((1, F3), lambda i: (0, 0)),
                  pl.BlockSpec((1, F3), lambda i: (0, 0)),
                  pl.BlockSpec(memory_space=pltpu.MemorySpace.SMEM)],
        out_specs=pl.BlockSpec((tb, 1), lambda i: (i, 0)),
        out_shape=jax.ShapeDtypeStruct((B_pad, 1), jnp.float32),
        compiler_params=cparams,
    )(h3, sc3, sh3, w4r, b4)

    return out_p[:B]


# ---------------- references & init ----------------

def reference_forward_bf16(x, p):
    """Pure-JAX reference mirroring the kernel math (bf16 matmuls, single-pass BN)."""
    def bn_relu(h, g, b):
        n = h.shape[0]
        mean = jnp.sum(h, axis=0) / n
        var = jnp.maximum(jnp.sum(h * h, axis=0) / n - mean * mean, 0.0)
        scale = g * jax.lax.rsqrt(var + EPS)
        shift = b - mean * scale
        return jnp.maximum(h * scale + shift, 0.0)

    h1 = jnp.dot(x.astype(jnp.bfloat16), p["w1"].T.astype(jnp.bfloat16),
                 preferred_element_type=jnp.float32)
    a1 = bn_relu(h1, p["g1"], p["b1"])
    h2 = jnp.dot(a1.astype(jnp.bfloat16), p["w2"].T.astype(jnp.bfloat16),
                 preferred_element_type=jnp.float32)
    a2 = bn_relu(h2, p["g2"], p["b2"])
    h3 = jnp.dot(a2.astype(jnp.bfloat16), p["w3"].T.astype(jnp.bfloat16),
                 preferred_element_type=jnp.float32)
    a3 = bn_relu(h3, p["g3"], p["b3"])
    return jnp.sum(a3 * p["w4"], axis=-1, keepdims=True) + p["b4"]


def reference_forward_f32(x, p):
    """All-f32, torch-like (two-pass BN) reference for a loose semantic check."""
    def bn_relu(h, g, b):
        m = jnp.mean(h, axis=0, keepdims=True)
        v = jnp.mean((h - m) ** 2, axis=0, keepdims=True)
        return jnp.maximum(g * ((h - m) * jax.lax.rsqrt(v + EPS)) + b, 0.0)

    h = bn_relu(x @ p["w1"].T, p["g1"], p["b1"])
    h = bn_relu(h @ p["w2"].T, p["g2"], p["b2"])
    h = bn_relu(h @ p["w3"].T, p["g3"], p["b3"])
    return h @ p["w4"].T + p["b4"]


def init_params(key, number_of_features, hl1, hl2, hl3):
    ks = jax.random.split(key, 11)

    def lin(k, fan_out, fan_in):
        bound = 1.0 / jnp.sqrt(fan_in)
        return jax.random.uniform(k, (fan_out, fan_in), jnp.float32, -bound, bound)

    bnd4 = 1.0 / jnp.sqrt(hl3)
    return {
        "w1": lin(ks[0], hl1, number_of_features),
        "w2": lin(ks[1], hl2, hl1),
        "w3": lin(ks[2], hl3, hl2),
        "w4": lin(ks[3], 1, hl3),
        "b4": jax.random.uniform(ks[4], (1, 1), jnp.float32, -bnd4, bnd4),
        "g1": 1.0 + 0.1 * jax.random.normal(ks[5], (1, hl1), jnp.float32),
        "b1": 0.1 * jax.random.normal(ks[6], (1, hl1), jnp.float32),
        "g2": 1.0 + 0.1 * jax.random.normal(ks[7], (1, hl2), jnp.float32),
        "b2": 0.1 * jax.random.normal(ks[8], (1, hl2), jnp.float32),
        "g3": 1.0 + 0.1 * jax.random.normal(ks[9], (1, hl3), jnp.float32),
        "b3": 0.1 * jax.random.normal(ks[10], (1, hl3), jnp.float32),
    }


if __name__ == "__main__":
    number_of_features, hl1, hl2, hl3 = 16, 32, 32, 16
    batch = 50        # deliberately NOT a tile multiple -> exercises pad + mask path
    batch_tile = 16   # small tile so the demo runs a real multi-step ("parallel") grid

    key = jax.random.PRNGKey(0)
    k_x, k_p = jax.random.split(key)
    x = jax.random.normal(k_x, (batch, number_of_features), jnp.float32)
    params = init_params(k_p, number_of_features, hl1, hl2, hl3)

    fwd = jax.jit(lambda xx, pp: simplenet_3bn_forward(xx, pp, batch_tile=batch_tile))
    out = jax.block_until_ready(fwd(x, params))

    assert out.shape == (batch, 1)
    ref_b = reference_forward_bf16(x, params)
    ref_f = reference_forward_f32(x, params)
    assert jnp.allclose(out, ref_b, atol=2e-3, rtol=2e-3), \
        float(jnp.max(jnp.abs(out - ref_b)))
    assert jnp.allclose(out, ref_f, atol=1e-1, rtol=1e-1), \
        float(jnp.max(jnp.abs(out - ref_f)))

    print("KERNEL_OK")
</pallas_src>

<mosaic_0001>
module attributes {stable_mosaic.version = 11 : i64} {
  func.func @_linear_stats_kernel(%arg0: i32, %arg1: memref<16x16xf32, #tpu.memory_space<vmem>>, %arg2: memref<16x32xbf16, #tpu.memory_space<vmem>>, %arg3: memref<16x32xf32, #tpu.memory_space<vmem>>, %arg4: memref<1x2x32xf32, #tpu.memory_space<vmem>>) attributes {dimension_semantics = [#tpu.dimension_semantics<parallel>], iteration_bounds = array<i64: 4>, scalar_prefetch = 0 : i64, scratch_operands = 0 : i64, tpu.core_type = #tpu.core_type<tc>, window_params = [{transform_indices = @transform_0, window_bounds = array<i64: 16, 16>}, {pipeline_mode = #tpu.pipeline_mode<synchronous>, transform_indices = @transform_1, window_bounds = array<i64: 16, 32>}, {transform_indices = @transform_2, window_bounds = array<i64: 16, 32>}, {transform_indices = @transform_3, window_bounds = array<i64: 1, 2, 32>}]} {
    %c0 = arith.constant 0 : index
    %c0_0 = arith.constant 0 : index
    %0 = vector.load %arg1[%c0, %c0_0] : memref<16x16xf32, #tpu.memory_space<vmem>>, vector<16x16xf32>
    %1 = arith.truncf %0 : vector<16x16xf32> to vector<16x16xbf16>
    %c0_1 = arith.constant 0 : index
    %c0_2 = arith.constant 0 : index
    %2 = vector.load %arg2[%c0_1, %c0_2] : memref<16x32xbf16, #tpu.memory_space<vmem>>, vector<16x32xbf16>
    %cst = arith.constant dense<0.000000e+00> : vector<16x32xf32>
    %3 = tpu.matmul %1, %2, %cst {dimension_numbers = #tpu.dot_dimension_numbers<[1], [0], [0], [1], [0, 0, 1, 1], [], []>} : vector<16x16xbf16>, vector<16x32xbf16>, vector<16x32xf32> -> vector<16x32xf32>
    %c0_3 = arith.constant 0 : index
    %c0_4 = arith.constant 0 : index
    %4 = vector.load %arg3[%c0_3, %c0_4] : memref<16x32xf32, #tpu.memory_space<vmem>>, vector<16x32xf32>
    tpu.vector_store %arg3[%c0_3, %c0_4], %3 {strides = array<i32>} : memref<16x32xf32, #tpu.memory_space<vmem>>, vector<16x32xf32>,
    %cst_5 = arith.constant dense<0.000000e+00> : vector<32xf32>
    %5 = vector.multi_reduction <add>, %3, %cst_5 [0] : vector<16x32xf32> to vector<32xf32>
    %6 = vector.shape_cast %5 : vector<32xf32> to vector<1x32xf32>
    %7 = arith.mulf %3, %3 : vector<16x32xf32>
    %cst_6 = arith.constant dense<0.000000e+00> : vector<32xf32>
    %8 = vector.multi_reduction <add>, %7, %cst_6 [0] : vector<16x32xf32> to vector<32xf32>
    %9 = vector.shape_cast %8 : vector<32xf32> to vector<1x32xf32>
    %10 = tpu.concatenate %6, %9 in 0 : vector<1x32xf32>, vector<1x32xf32> -> vector<2x32xf32>
    %11 = vector.shape_cast %10 : vector<2x32xf32> to vector<1x2x32xf32>
    %c0_7 = arith.constant 0 : index
    %c0_8 = arith.constant 0 : index
    %c0_9 = arith.constant 0 : index
    %12 = vector.load %arg4[%c0_7, %c0_8, %c0_9] : memref<1x2x32xf32, #tpu.memory_space<vmem>>, vector<1x2x32xf32>
    tpu.vector_store %arg4[%c0_7, %c0_8, %c0_9], %11 {strides = array<i32>} : memref<1x2x32xf32, #tpu.memory_space<vmem>>, vector<1x2x32xf32>,
    return
  }
  func.func @transform_0(%arg0: i32) -> (i32, i32) {
    %c0_i32 = arith.constant 0 : i32
    %c0_i32_0 = arith.constant 0 : i32
    return %arg0, %c0_i32 : i32, i32
  }
  func.func @transform_1(%arg0: i32) -> (i32, i32) {
    %c0_i32 = arith.constant 0 : i32
    %c0_i32_0 = arith.constant 0 : i32
    %c0_i32_1 = arith.constant 0 : i32
    return %c0_i32, %c0_i32_0 : i32, i32
  }
  func.func @transform_2(%arg0: i32) -> (i32, i32) {
    %c0_i32 = arith.constant 0 : i32
    %c0_i32_0 = arith.constant 0 : i32
    return %arg0, %c0_i32 : i32, i32
  }
  func.func @transform_3(%arg0: i32) -> (i32, i32, i32) {
    %c0_i32 = arith.constant 0 : i32
    %c0_i32_0 = arith.constant 0 : i32
    %c0_i32_1 = arith.constant 0 : i32
    return %arg0, %c0_i32, %c0_i32_0 : i32, i32, i32
  }
}

module attributes {stable_mosaic.version = 11 : i64} {
  func.func @_bn_relu_linear_stats_kernel(%arg0: i32, %arg1: memref<16x32xf32, #tpu.memory_space<vmem>>, %arg2: memref<1x32xf32, #tpu.memory_space<vmem>>, %arg3: memref<1x32xf32, #tpu.memory_space<vmem>>, %arg4: memref<16x1xf32, #tpu.memory_space<vmem>>, %arg5: memref<32x32xbf16, #tpu.memory_space<vmem>>, %arg6: memref<16x32xf32, #tpu.memory_space<vmem>>, %arg7: memref<1x2x32xf32, #tpu.memory_space<vmem>>) attributes {dimension_semantics = [#tpu.dimension_semantics<parallel>], iteration_bounds = array<i64: 4>, scalar_prefetch = 0 : i64, scratch_operands = 0 : i64, tpu.core_type = #tpu.core_type<tc>, window_params = [{transform_indices = @transform_0, window_bounds = array<i64: 16, 32>}, {pipeline_mode = #tpu.pipeline_mode<synchronous>, transform_indices = @transform_1, window_bounds = array<i64: 1, 32>}, {pipeline_mode = #tpu.pipeline_mode<synchronous>, transform_indices = @transform_2, window_bounds = array<i64: 1, 32>}, {transform_indices = @transform_3, window_bounds = array<i64: 16, 1>}, {pipeline_mode = #tpu.pipeline_mode<synchronous>, transform_indices = @transform_4, window_bounds = array<i64: 32, 32>}, {transform_indices = @transform_5, window_bounds = array<i64: 16, 32>}, {transform_indices = @transform_6, window_bounds = array<i64: 1, 2, 32>}]} {
    %c0 = arith.constant 0 : index
    %c0_0 = arith.constant 0 : index
    %0 = vector.load %arg1[%c0, %c0_0] : memref<16x32xf32, #tpu.memory_space<vmem>>, vector<16x32xf32>
    %c0_1 = arith.constant 0 : index
    %c0_2 = arith.constant 0 : index
    %1 = vector.load %arg2[%c0_1, %c0_2] : memref<1x32xf32, #tpu.memory_space<vmem>>, vector<1x32xf32>
    %2 = vector.broadcast %1 : vector<1x32xf32> to vector<16x32xf32>
    %3 = arith.mulf %0, %2 : vector<16x32xf32>
    %c0_3 = arith.constant 0 : index
    %c0_4 = arith.constant 0 : index
    %4 = vector.load %arg3[%c0_3, %c0_4] : memref<1x32xf32, #tpu.memory_space<vmem>>, vector<1x32xf32>
    %5 = vector.broadcast %4 : vector<1x32xf32> to vector<16x32xf32>
    %6 = arith.addf %3, %5 : vector<16x32xf32>
    %cst = arith.constant 0.000000e+00 : f32
    %7 = vector.broadcast %cst : f32 to vector<16x32xf32>
    %8 = arith.maximumf %6, %7 : vector<16x32xf32>
    %c0_5 = arith.constant 0 : index
    %c0_6 = arith.constant 0 : index
    %9 = vector.load %arg4[%c0_5, %c0_6] : memref<16x1xf32, #tpu.memory_space<vmem>>, vector<16x1xf32>
    %10 = vector.broadcast %9 : vector<16x1xf32> to vector<16x32xf32>
    %11 = arith.mulf %8, %10 : vector<16x32xf32>
    %12 = arith.truncf %11 : vector<16x32xf32> to vector<16x32xbf16>
    %c0_7 = arith.constant 0 : index
    %c0_8 = arith.constant 0 : index
    %13 = vector.load %arg5[%c0_7, %c0_8] : memref<32x32xbf16, #tpu.memory_space<vmem>>, vector<32x32xbf16>
    %cst_9 = arith.constant dense<0.000000e+00> : vector<16x32xf32>
    %14 = tpu.matmul %12, %13, %cst_9 {dimension_numbers = #tpu.dot_dimension_numbers<[1], [0], [0], [1], [0, 0, 1, 1], [], []>} : vector<16x32xbf16>, vector<32x32xbf16>, vector<16x32xf32> -> vector<16x32xf32>
    %c0_10 = arith.constant 0 : index
    %c0_11 = arith.constant 0 : index
    %15 = vector.load %arg6[%c0_10, %c0_11] : memref<16x32xf32, #tpu.memory_space<vmem>>, vector<16x32xf32>
    tpu.vector_store %arg6[%c0_10, %c0_11], %14 {strides = array<i32>} : memref<16x32xf32, #tpu.memory_space<vmem>>, vector<16x32xf32>,
    %cst_12 = arith.constant dense<0.000000e+00> : vector<32xf32>
    %16 = vector.multi_reduction <add>, %14, %cst_12 [0] : vector<16x32xf32> to vector<32xf32>
    %17 = vector.shape_cast %16 : vector<32xf32> to vector<1x32xf32>
    %18 = arith.mulf %14, %14 : vector<16x32xf32>
    %cst_13 = arith.constant dense<0.000000e+00> : vector<32xf32>
    %19 = vector.multi_reduction <add>, %18, %cst_13 [0] : vector<16x32xf32> to vector<32xf32>
    %20 = vector.shape_cast %19 : vector<32xf32> to vector<1x32xf32>
    %21 = tpu.concatenate %17, %20 in 0 : vector<1x32xf32>, vector<1x32xf32> -> vector<2x32xf32>
    %22 = vector.shape_cast %21 : vector<2x32xf32> to vector<1x2x32xf32>
    %c0_14 = arith.constant 0 : index
    %c0_15 = arith.constant 0 : index
    %c0_16 = arith.constant 0 : index
    %23 = vector.load %arg7[%c0_14, %c0_15, %c0_16] : memref<1x2x32xf32, #tpu.memory_space<vmem>>, vector<1x2x32xf32>
    tpu.vector_store %arg7[%c0_14, %c0_15, %c0_16], %22 {strides = array<i32>} : memref<1x2x32xf32, #tpu.memory_space<vmem>>, vector<1x2x32xf32>,
    return
  }
  func.func @transform_0(%arg0: i32) -> (i32, i32) {
    %c0_i32 = arith.constant 0 : i32
    %c0_i32_0 = arith.constant 0 : i32
    return %arg0, %c0_i32 : i32, i32
  }
  func.func @transform_1(%arg0: i32) -> (i32, i32) {
    %c0_i32 = arith.constant 0 : i32
    %c0_i32_0 = arith.constant 0 : i32
    %c0_i32_1 = arith.constant 0 : i32
    return %c0_i32, %c0_i32_0 : i32, i32
  }
  func.func @transform_2(%arg0: i32) -> (i32, i32) {
    %c0_i32 = arith.constant 0 : i32
    %c0_i32_0 = arith.constant 0 : i32
    %c0_i32_1 = arith.constant 0 : i32
    return %c0_i32, %c0_i32_0 : i32, i32
  }
  func.func @transform_3(%arg0: i32) -> (i32, i32) {
    %c0_i32 = arith.constant 0 : i32
    %c0_i32_0 = arith.constant 0 : i32
    return %arg0, %c0_i32 : i32, i32
  }
  func.func @transform_4(%arg0: i32) -> (i32, i32) {
    %c0_i32 = arith.constant 0 : i32
    %c0_i32_0 = arith.constant 0 : i32
    %c0_i32_1 = arith.constant 0 : i32
    return %c0_i32, %c0_i32_0 : i32, i32
  }
  func.func @transform_5(%arg0: i32) -> (i32, i32) {
    %c0_i32 = arith.constant 0 : i32
    %c0_i32_0 = arith.constant 0 : i32
    return %arg0, %c0_i32 : i32, i32
  }
  func.func @transform_6(%arg0: i32) -> (i32, i32, i32) {
    %c0_i32 = arith.constant 0 : i32
    %c0_i32_0 = arith.constant 0 : i32
    %c0_i32_1 = arith.constant 0 : i32
    return %arg0, %c0_i32, %c0_i32_0 : i32, i32, i32
  }
}

module attributes {stable_mosaic.version = 11 : i64} {
  func.func @_bn_relu_linear_stats_kernel(%arg0: i32, %arg1: memref<16x32xf32, #tpu.memory_space<vmem>>, %arg2: memref<1x32xf32, #tpu.memory_space<vmem>>, %arg3: memref<1x32xf32, #tpu.memory_space<vmem>>, %arg4: memref<16x1xf32, #tpu.memory_space<vmem>>, %arg5: memref<32x16xbf16, #tpu.memory_space<vmem>>, %arg6: memref<16x16xf32, #tpu.memory_space<vmem>>, %arg7: memref<1x2x16xf32, #tpu.memory_space<vmem>>) attributes {dimension_semantics = [#tpu.dimension_semantics<parallel>], iteration_bounds = array<i64: 4>, scalar_prefetch = 0 : i64, scratch_operands = 0 : i64, tpu.core_type = #tpu.core_type<tc>, window_params = [{transform_indices = @transform_0, window_bounds = array<i64: 16, 32>}, {pipeline_mode = #tpu.pipeline_mode<synchronous>, transform_indices = @transform_1, window_bounds = array<i64: 1, 32>}, {pipeline_mode = #tpu.pipeline_mode<synchronous>, transform_indices = @transform_2, window_bounds = array<i64: 1, 32>}, {transform_indices = @transform_3, window_bounds = array<i64: 16, 1>}, {pipeline_mode = #tpu.pipeline_mode<synchronous>, transform_indices = @transform_4, window_bounds = array<i64: 32, 16>}, {transform_indices = @transform_5, window_bounds = array<i64: 16, 16>}, {transform_indices = @transform_6, window_bounds = array<i64: 1, 2, 16>}]} {
    %c0 = arith.constant 0 : index
    %c0_0 = arith.constant 0 : index
    %0 = vector.load %arg1[%c0, %c0_0] : memref<16x32xf32, #tpu.memory_space<vmem>>, vector<16x32xf32>
    %c0_1 = arith.constant 0 : index
    %c0_2 = arith.constant 0 : index
    %1 = vector.load %arg2[%c0_1, %c0_2] : memref<1x32xf32, #tpu.memory_space<vmem>>, vector<1x32xf32>
    %2 = vector.broadcast %1 : vector<1x32xf32> to vector<16x32xf32>
    %3 = arith.mulf %0, %2 : vector<16x32xf32>
    %c0_3 = arith.constant 0 : index
    %c0_4 = arith.constant 0 : index
    %4 = vector.load %arg3[%c0_3, %c0_4] : memref<1x32xf32, #tpu.memory_space<vmem>>, vector<1x32xf32>
    %5 = vector.broadcast %4 : vector<1x32xf32> to vector<16x32xf32>
    %6 = arith.addf %3, %5 : vector<16x32xf32>
    %cst = arith.constant 0.000000e+00 : f32
    %7 = vector.broadcast %cst : f32 to vector<16x32xf32>
    %8 = arith.maximumf %6, %7 : vector<16x32xf32>
    %c0_5 = arith.constant 0 : index
    %c0_6 = arith.constant 0 : index
    %9 = vector.load %arg4[%c0_5, %c0_6] : memref<16x1xf32, #tpu.memory_space<vmem>>, vector<16x1xf32>
    %10 = vector.broadcast %9 : vector<16x1xf32> to vector<16x32xf32>
    %11 = arith.mulf %8, %10 : vector<16x32xf32>
    %12 = arith.truncf %11 : vector<16x32xf32> to vector<16x32xbf16>
    %c0_7 = arith.constant 0 : index
    %c0_8 = arith.constant 0 : index
    %13 = vector.load %arg5[%c0_7, %c0_8] : memref<32x16xbf16, #tpu.memory_space<vmem>>, vector<32x16xbf16>
    %cst_9 = arith.constant dense<0.000000e+00> : vector<16x16xf32>
    %14 = tpu.matmul %12, %13, %cst_9 {dimension_numbers = #tpu.dot_dimension_numbers<[1], [0], [0], [1], [0, 0, 1, 1], [], []>} : vector<16x32xbf16>, vector<32x16xbf16>, vector<16x16xf32> -> vector<16x16xf32>
    %c0_10 = arith.constant 0 : index
    %c0_11 = arith.constant 0 : index
    %15 = vector.load %arg6[%c0_10, %c0_11] : memref<16x16xf32, #tpu.memory_space<vmem>>, vector<16x16xf32>
    tpu.vector_store %arg6[%c0_10, %c0_11], %14 {strides = array<i32>} : memref<16x16xf32, #tpu.memory_space<vmem>>, vector<16x16xf32>,
    %cst_12 = arith.constant dense<0.000000e+00> : vector<16xf32>
    %16 = vector.multi_reduction <add>, %14, %cst_12 [0] : vector<16x16xf32> to vector<16xf32>
    %17 = vector.shape_cast %16 : vector<16xf32> to vector<1x16xf32>
    %18 = arith.mulf %14, %14 : vector<16x16xf32>
    %cst_13 = arith.constant dense<0.000000e+00> : vector<16xf32>
    %19 = vector.multi_reduction <add>, %18, %cst_13 [0] : vector<16x16xf32> to vector<16xf32>
    %20 = vector.shape_cast %19 : vector<16xf32> to vector<1x16xf32>
    %21 = tpu.concatenate %17, %20 in 0 : vector<1x16xf32>, vector<1x16xf32> -> vector<2x16xf32>
    %22 = vector.shape_cast %21 : vector<2x16xf32> to vector<1x2x16xf32>
    %c0_14 = arith.constant 0 : index
    %c0_15 = arith.constant 0 : index
    %c0_16 = arith.constant 0 : index
    %23 = vector.load %arg7[%c0_14, %c0_15, %c0_16] : memref<1x2x16xf32, #tpu.memory_space<vmem>>, vector<1x2x16xf32>
    tpu.vector_store %arg7[%c0_14, %c0_15, %c0_16], %22 {strides = array<i32>} : memref<1x2x16xf32, #tpu.memory_space<vmem>>, vector<1x2x16xf32>,
    return
  }
  func.func @transform_0(%arg0: i32) -> (i32, i32) {
    %c0_i32 = arith.constant 0 : i32
    %c0_i32_0 = arith.constant 0 : i32
    return %arg0, %c0_i32 : i32, i32
  }
  func.func @transform_1(%arg0: i32) -> (i32, i32) {
    %c0_i32 = arith.constant 0 : i32
    %c0_i32_0 = arith.constant 0 : i32
    %c0_i32_1 = arith.constant 0 : i32
    return %c0_i32, %c0_i32_0 : i32, i32
  }
  func.func @transform_2(%arg0: i32) -> (i32, i32) {
    %c0_i32 = arith.constant 0 : i32
    %c0_i32_0 = arith.constant 0 : i32
    %c0_i32_1 = arith.constant 0 : i32
    return %c0_i32, %c0_i32_0 : i32, i32
  }
  func.func @transform_3(%arg0: i32) -> (i32, i32) {
    %c0_i32 = arith.constant 0 : i32
    %c0_i32_0 = arith.constant 0 : i32
    return %arg0, %c0_i32 : i32, i32
  }
  func.func @transform_4(%arg0: i32) -> (i32, i32) {
    %c0_i32 = arith.constant 0 : i32
    %c0_i32_0 = arith.constant 0 : i32
    %c0_i32_1 = arith.constant 0 : i32
    return %c0_i32, %c0_i32_0 : i32, i32
  }
  func.func @transform_5(%arg0: i32) -> (i32, i32) {
    %c0_i32 = arith.constant 0 : i32
    %c0_i32_0 = arith.constant 0 : i32
    return %arg0, %c0_i32 : i32, i32
  }
  func.func @transform_6(%arg0: i32) -> (i32, i32, i32) {
    %c0_i32 = arith.constant 0 : i32
    %c0_i32_0 = arith.constant 0 : i32
    %c0_i32_1 = arith.constant 0 : i32
    return %arg0, %c0_i32, %c0_i32_0 : i32, i32, i32
  }
}

module attributes {stable_mosaic.version = 11 : i64} {
  func.func @_bn_relu_head_kernel(%arg0: i32, %arg1: memref<16x16xf32, #tpu.memory_space<vmem>>, %arg2: memref<1x16xf32, #tpu.memory_space<vmem>>, %arg3: memref<1x16xf32, #tpu.memory_space<vmem>>, %arg4: memref<1x16xf32, #tpu.memory_space<vmem>>, %arg5: memref<1xf32, #tpu.memory_space<smem>>, %arg6: memref<16x1xf32, #tpu.memory_space<vmem>>) attributes {dimension_semantics = [#tpu.dimension_semantics<parallel>], iteration_bounds = array<i64: 4>, scalar_prefetch = 0 : i64, scratch_operands = 0 : i64, tpu.core_type = #tpu.core_type<tc>, window_params = [{transform_indices = @transform_0, window_bounds = array<i64: 16, 16>}, {pipeline_mode = #tpu.pipeline_mode<synchronous>, transform_indices = @transform_1, window_bounds = array<i64: 1, 16>}, {pipeline_mode = #tpu.pipeline_mode<synchronous>, transform_indices = @transform_2, window_bounds = array<i64: 1, 16>}, {pipeline_mode = #tpu.pipeline_mode<synchronous>, transform_indices = @transform_3, window_bounds = array<i64: 1, 16>}, {transform_indices = @transform_4, window_bounds = array<i64: 1>}, {transform_indices = @transform_5, window_bounds = array<i64: 16, 1>}]} {
    %c0 = arith.constant 0 : index
    %c0_0 = arith.constant 0 : index
    %0 = vector.load %arg1[%c0, %c0_0] : memref<16x16xf32, #tpu.memory_space<vmem>>, vector<16x16xf32>
    %c0_1 = arith.constant 0 : index
    %c0_2 = arith.constant 0 : index
    %1 = vector.load %arg2[%c0_1, %c0_2] : memref<1x16xf32, #tpu.memory_space<vmem>>, vector<1x16xf32>
    %2 = vector.broadcast %1 : vector<1x16xf32> to vector<16x16xf32>
    %3 = arith.mulf %0, %2 : vector<16x16xf32>
    %c0_3 = arith.constant 0 : index
    %c0_4 = arith.constant 0 : index
    %4 = vector.load %arg3[%c0_3, %c0_4] : memref<1x16xf32, #tpu.memory_space<vmem>>, vector<1x16xf32>
    %5 = vector.broadcast %4 : vector<1x16xf32> to vector<16x16xf32>
    %6 = arith.addf %3, %5 : vector<16x16xf32>
    %cst = arith.constant 0.000000e+00 : f32
    %7 = vector.broadcast %cst : f32 to vector<16x16xf32>
    %8 = arith.maximumf %6, %7 : vector<16x16xf32>
    %c0_5 = arith.constant 0 : index
    %c0_6 = arith.constant 0 : index
    %9 = vector.load %arg4[%c0_5, %c0_6] : memref<1x16xf32, #tpu.memory_space<vmem>>, vector<1x16xf32>
    %10 = vector.broadcast %9 : vector<1x16xf32> to vector<16x16xf32>
    %11 = arith.mulf %8, %10 : vector<16x16xf32>
    %cst_7 = arith.constant dense<0.000000e+00> : vector<16xf32>
    %12 = vector.multi_reduction <add>, %11, %cst_7 [1] : vector<16x16xf32> to vector<16xf32>
    %13 = vector.shape_cast %12 : vector<16xf32> to vector<16x1xf32>
    %c0_8 = arith.constant 0 : index
    %14 = memref.load %arg5[%c0_8] : memref<1xf32, #tpu.memory_space<smem>>
    %15 = vector.broadcast %14 : f32 to vector<16x1xf32>
    %16 = arith.addf %13, %15 : vector<16x1xf32>
    %c0_9 = arith.constant 0 : index
    %c0_10 = arith.constant 0 : index
    %17 = vector.load %arg6[%c0_9, %c0_10] : memref<16x1xf32, #tpu.memory_space<vmem>>, vector<16x1xf32>
    tpu.vector_store %arg6[%c0_9, %c0_10], %16 {strides = array<i32>} : memref<16x1xf32, #tpu.memory_space<vmem>>, vector<16x1xf32>,
    return
  }
  func.func @transform_0(%arg0: i32) -> (i32, i32) {
    %c0_i32 = arith.constant 0 : i32
    %c0_i32_0 = arith.constant 0 : i32
    return %arg0, %c0_i32 : i32, i32
  }
  func.func @transform_1(%arg0: i32) -> (i32, i32) {
    %c0_i32 = arith.constant 0 : i32
    %c0_i32_0 = arith.constant 0 : i32
    %c0_i32_1 = arith.constant 0 : i32
    return %c0_i32, %c0_i32_0 : i32, i32
  }
  func.func @transform_2(%arg0: i32) -> (i32, i32) {
    %c0_i32 = arith.constant 0 : i32
    %c0_i32_0 = arith.constant 0 : i32
    %c0_i32_1 = arith.constant 0 : i32
    return %c0_i32, %c0_i32_0 : i32, i32
  }
  func.func @transform_3(%arg0: i32) -> (i32, i32) {
    %c0_i32 = arith.constant 0 : i32
    %c0_i32_0 = arith.constant 0 : i32
    %c0_i32_1 = arith.constant 0 : i32
    return %c0_i32, %c0_i32_0 : i32, i32
  }
  func.func @transform_4(%arg0: i32) -> i32 {
    %c0_i32 = arith.constant 0 : i32
    %c0_i32_0 = arith.constant 0 : i32
    return %c0_i32 : i32
  }
  func.func @transform_5(%arg0: i32) -> (i32, i32) {
    %c0_i32 = arith.constant 0 : i32
    %c0_i32_0 = arith.constant 0 : i32
    return %arg0, %c0_i32 : i32, i32
  }
}

</mosaic_0001>

<llo_original>
// kernel: _lambda_.4
$region0: #{_lambda_.4}
  #allocation0 [shape = 'u32[]', space=smem, size = 0x4, offset = 0x4, fixed_abs, tag = 'smem constant byte address 0x4 - core index']
  #allocation1 [shape = 'u32[144,128]{1,0:T(1,128)}', space=vmem, size = 0x12000, scoped, tag = 'internal scratch']
  %s0 = inlined_call_operand.vmem [shape: f32[64,16], index: 0, kind: input, shape index: {}]
  %s1 = inlined_call_operand.vmem [shape: bf16[16,32], index: 1, kind: input, shape index: {}]
  %s2 = inlined_call_operand.vmem [shape: f32[64,32], index: 2, kind: output, shape index: {0}]
  %s3 = inlined_call_operand.vmem [shape: f32[4,2,32], index: 3, kind: output, shape index: {1}]
  %4 = xla_tuple %s2, %s3
  %s5 = sld [smem:[#allocation0]]
  $region49: #{_lambda_.4} parent=0
    _
  %s7 = ssub.s32 1, %s5
  %s8 = scalar_select 0, %s7, %s5
  loop: start=0, step=1, limit=6
  $region2: #{_lambda_.4} parent=0 // loop_pre_header
    _
  $region3: #{_lambda_.4} parent=0 // loop_header
    %s10 = sphi 0, %s14
    %p11 = scmp.ge.s32.totalorder %s10, 6
    %s20 = sphi 0, %s22
    %s23 = sphi 0, %s20
    %s24 = sphi 0, %s23
    %s40 = sphi 0, %s24
    %s44 = sphi 0, %s44
    %s46 = sphi 0, %s44
    %s47 = sphi 0, %s46
    %s61 = sphi 0, %s47
    %s67 = sphi 0, %s69
    %s70 = sphi 0, %s67
    %s71 = sphi 0, %s70
    %s87 = sphi 0, %s71
    %s93 = sphi 0, %s95
    %s96 = sphi 0, %s93
    %s97 = sphi 0, %s96
    %s113 = sphi 0, %s97
  $region4: #{_lambda_.4} parent=0 // loop_header_branch
    %13 = sbr.rel (%p11) target = $region8
  $region5: #{_lambda_.4} parent=0 // loop_body
    %s15 = ssub.s32 %s10, 1
    %s16 = ssub.s32 %s10, 2
    %s17 = sadd.s32 %s10, 1
    %s18 = ssub.s32 %s10, %s17
    %p19 = scmp.eq.s32.totalorder %s18, 0
    %s21 = sadd.s32 %s20, 1
    %s22 = scalar_select %p19, %s20, %s21
    %p25 = pneg %p19
    %p26 = scmp.eq.s32.totalorder %s10, 3
    %p27 = por %p25, %p26
    %p28 = scmp.ne.s32.totalorder %s20, %s23
    %p29 = scmp.eq.s32.totalorder %s10, 0
    %p30 = por %p28, %p29
    %p31 = scmp.ne.s32.totalorder %s20, %s23
    %p32 = scmp.eq.s32.totalorder %s15, 3
    %p33 = por %p31, %p32
    %p34 = scmp.ne.s32.totalorder %s23, %s24
    %p35 = scmp.eq.s32.totalorder %s15, 0
    %p36 = por %p34, %p35
    %p37 = scmp.ne.s32.totalorder %s23, %s24
    %p38 = scmp.eq.s32.totalorder %s16, 3
    %p39 = por %p37, %p38
    %p41 = scmp.ne.s32.totalorder %s24, %s40
    %p42 = scmp.eq.s32.totalorder %s16, 0
    %p43 = por %p41, %p42
    %s45 = sadd.s32 %s44, 1
    %p48 = scmp.eq.s32.totalorder %s10, 3
    %p49 = scmp.ne.s32.totalorder %s44, %s46
    %p50 = scmp.eq.s32.totalorder %s10, 0
    %p51 = por %p49, %p50
    %p52 = scmp.ne.s32.totalorder %s44, %s46
    %p53 = scmp.eq.s32.totalorder %s15, 3
    %p54 = por %p52, %p53
    %p55 = scmp.ne.s32.totalorder %s46, %s47
    %p56 = scmp.eq.s32.totalorder %s15, 0
    %p57 = por %p55, %p56
    %p58 = scmp.ne.s32.totalorder %s46, %s47
    %p59 = scmp.eq.s32.totalorder %s16, 3
    %p60 = por %p58, %p59
    %p62 = scmp.ne.s32.totalorder %s47, %s61
    %p63 = scmp.eq.s32.totalorder %s16, 0
    %p64 = por %p62, %p63
    %s65 = ssub.s32 %s10, %s17
    %p66 = scmp.eq.s32.totalorder %s65, 0
    %s68 = sadd.s32 %s67, 1
    %s69 = scalar_select %p66, %s67, %s68
    %p72 = pneg %p66
    %p73 = scmp.eq.s32.totalorder %s10, 3
    %p74 = por %p72, %p73
    %p75 = scmp.ne.s32.totalorder %s67, %s70
    %p76 = scmp.eq.s32.totalorder %s10, 0
    %p77 = por %p75, %p76
    %p78 = scmp.ne.s32.totalorder %s67, %s70
    %p79 = scmp.eq.s32.totalorder %s15, 3
    %p80 = por %p78, %p79
    %p81 = scmp.ne.s32.totalorder %s70, %s71
    %p82 = scmp.eq.s32.totalorder %s15, 0
    %p83 = por %p81, %p82
    %p84 = scmp.ne.s32.totalorder %s70, %s71
    %p85 = scmp.eq.s32.totalorder %s16, 3
    %p86 = por %p84, %p85
    %p88 = scmp.ne.s32.totalorder %s71, %s87
    %p89 = scmp.eq.s32.totalorder %s16, 0
    %p90 = por %p88, %p89
    %s91 = ssub.s32 %s10, %s17
    %p92 = scmp.eq.s32.totalorder %s91, 0
    %s94 = sadd.s32 %s93, 1
    %s95 = scalar_select %p92, %s93, %s94
    %p98 = pneg %p92
    %p99 = scmp.eq.s32.totalorder %s10, 3
    %p100 = por %p98, %p99
    %p101 = scmp.ne.s32.totalorder %s93, %s96
    %p102 = scmp.eq.s32.totalorder %s10, 0
    %p103 = por %p101, %p102
    %p104 = scmp.ne.s32.totalorder %s93, %s96
    %p105 = scmp.eq.s32.totalorder %s15, 3
    %p106 = por %p104, %p105
    %p107 = scmp.ne.s32.totalorder %s96, %s97
    %p108 = scmp.eq.s32.totalorder %s15, 0
    %p109 = por %p107, %p108
    %p110 = scmp.ne.s32.totalorder %s96, %s97
    %p111 = scmp.eq.s32.totalorder %s16, 3
    %p112 = por %p110, %p111
    %p114 = scmp.ne.s32.totalorder %s97, %s113
    %p115 = scmp.eq.s32.totalorder %s16, 0
    %p116 = por %p114, %p115
    %p117 = scmp.le.s32.totalorder 1, %s10
    %p118 = scmp.lt.s32.totalorder %s10, 5
    %p119 = pnand %p117, %p118
    %p120 = pneg %p119
    // Predicated region
    $region9: #{_lambda_.4} parent=5 // pred_check
      _
    $region10: #{_lambda_.4} parent=5 // pred_check_branch
      %122 = sbr.rel (%p119) target = $region12
    $region11: #{_lambda_.4} parent=5 // pred_region
      %s123 = ssub.s32 %s10, 1
      // Predicated region
      $region13: #{_lambda_.4} parent=11 // pred_check
        %p124 = pneg %p57
      $region14: #{_lambda_.4} parent=11 // pred_check_branch
        %126 = sbr.rel (%p124) target = $region16
      $region15: #{_lambda_.4} parent=11 // pred_region
        _
      $region16: #{_lambda_.4} parent=11 // pred_fallthru
        _
    $region12: #{_lambda_.4} parent=5 // pred_fallthru
      _
    %p127 = scmp.lt.s32.totalorder %s10, 4
    // Predicated region
    $region17: #{_lambda_.4} parent=5 // pred_check
      %p128 = pneg %p127
    $region18: #{_lambda_.4} parent=5 // pred_check_branch
      %130 = sbr.rel (%p128) target = $region20
    $region19: #{_lambda_.4} parent=5 // pred_region
      // Predicated region
      $region21: #{_lambda_.4} parent=19 // pred_check
        %p131 = pneg %p30
      $region22: #{_lambda_.4} parent=19 // pred_check_branch
        %133 = sbr.rel (%p131) target = $region24
      $region23: #{_lambda_.4} parent=19 // pred_region
        %s134 = smul.u32 2, %s10
        %p135 = scmp.lt.s32.totalorder %s134, 7
        %s136 = scalar_select %p135, %s134, 7
        %s137 = smul.addr %s136, 8
        %s138 = scalar_lea.vmem %s0, %s137
        %s139 = smul.u32 2, %s10
      $region24: #{_lambda_.4} parent=19 // pred_fallthru
        _
    $region20: #{_lambda_.4} parent=5 // pred_fallthru
      _
    %p140 = scmp.le.s32.totalorder 1, %s10
    %p141 = scmp.lt.s32.totalorder %s10, 5
    %p142 = pnand %p140, %p141
    %p143 = pneg %p142
    // Predicated region
    $region25: #{_lambda_.4} parent=5 // pred_check
      _
    $region26: #{_lambda_.4} parent=5 // pred_check_branch
      %145 = sbr.rel (%p142) target = $region28
    $region27: #{_lambda_.4} parent=5 // pred_region
      %s146 = ssub.s32 %s10, 1
      %s147 = smul.u32 2, %s15
      %p148 = scmp.lt.s32.totalorder %s147, 7
      %s149 = scalar_select %p148, %s147, 7
      %s150 = smul.addr %s149, 8
      %s151 = scalar_lea.vmem %s0, %s150
      %p152 = pneg %p36
      %p153 = pneg %p33
      %p154 = pneg %p57
      %p155 = pneg %p54
      %p156 = pneg %p83
      %p157 = pneg %p80
      %s158 = smul.u32 2, %s15
      %p159 = scmp.lt.s32.totalorder %s158, 7
      %s160 = scalar_select %p159, %s158, 7
      %s161 = smul.addr %s160, 8
      %s162 = scalar_lea.vmem %s2, %s161
      %p163 = pneg %p109
      %p164 = pneg %p106
      %p165 = scmp.lt.s32.totalorder %s15, 3
      %s166 = scalar_select %p165, %s15, 3
      %s167 = smul.addr %s166, 2
      %s168 = scalar_lea.vmem %s3, %s167
      %s169 = smul.u32 2, %s15
      %p170 = scmp.lt.s32.totalorder %s169, 7
      %s171 = scalar_select %p170, %s169, 7
      %s172 = smul.addr %s171, 8
      %s173 = scalar_lea.vmem %s0, %s172
      %s174 = smul.u32 2, %s15
      %s175 = smul.u32 2, %s15
      %p176 = scmp.lt.s32.totalorder %s175, 7
      %s177 = scalar_select %p176, %s175, 7
      %s178 = smul.addr %s177, 8
      %s179 = scalar_lea.vmem %s2, %s178
      %s180 = smul.u32 2, %s15
      %p181 = scmp.lt.s32.totalorder %s15, 3
      %s182 = scalar_select %p181, %s15, 3
      %s183 = smul.addr %s182, 2
      %s184 = scalar_lea.vmem %s3, %s183
      %v186 = vld [vmem:[%s173] sm:$0xff]
      %v187 = vld [vmem:[%s173 + $0x8] sm:$0xff]
      %v188 = vpack.c.bf16 %v187, %v186
      %v189 = vld [vmem:[%s1] sm:$0xf]
      %v190 = vld [vmem:[%s1 + $0x4] sm:$0xf]
      %v193 = vunpack.c.l.b16 %v189
      %v194 = vunpack.c.l.b16 %v190
      %v195 = vpack.c.b16 %v194, %v193
      %vm197 = vcmask 130048
      %v199 = vsel %vm197, %v188, 0
      %201 = vmatprep.subr.bf16.mxu0 0
      %202 = vmatpush1.bf16.msra.mxu0 0
      %203 = vmatprep.subr.bf16.mxu0 0
      %204 = vmatpush1.bf16.msra.mxu0 0
      %205 = vmatprep.subr.bf16.mxu0 0
      %206 = vmatpush1.bf16.msra.mxu0 0
      %207 = vmatprep.subr.bf16.mxu0 0
      %208 = vmatpush1.bf16.msra.mxu0 0
      %209 = vmatprep.subr.bf16.mxu0 0
      %210 = vmatpush1.bf16.msra.mxu0 0
      %211 = vmatprep.subr.bf16.mxu0 0
      %212 = vmatpush1.bf16.msra.mxu0 0
      %213 = vmatprep.subr.bf16.mxu0 0
      %214 = vmatpush1.bf16.msra.mxu0 0
      %215 = vmatprep.subr.bf16.mxu0 0
      %216 = vmatpush1.bf16.msra.mxu0 %v195
      %217 = vmatprep.subr.bf16.mxu0 0
      %218 = vmatpush2.bf16.msra.mxu0 0
      %219 = vmatprep.subr.bf16.mxu0 0
      %220 = vmatpush2.bf16.msra.mxu0 0
      %221 = vmatprep.subr.bf16.mxu0 0
      %222 = vmatpush2.bf16.msra.mxu0 0
      %223 = vmatprep.subr.bf16.mxu0 0
      %224 = vmatpush2.bf16.msra.mxu0 0
      %225 = vmatprep.subr.bf16.mxu0 0
      %226 = vmatpush2.bf16.msra.mxu0 0
      %227 = vmatprep.subr.bf16.mxu0 0
      %228 = vmatpush2.bf16.msra.mxu0 0
      %229 = vmatprep.subr.bf16.mxu0 0
      %230 = vmatpush2.bf16.msra.mxu0 0
      %231 = vmatprep.subr.bf16.mxu0 0
      %232 = vmatpush2.bf16.msra.mxu0 0
      %233 = vmatprep.mubr.bf16.mxu0 0
      %234 = vmatmul.mubr.bf16.gmra.mxu0 %v199
      %v235 = vpop.f32.mrf.mxu0
      %v236 = vadd.f32 0.0, %v235
      %v237 = vpop.f32.mrf.mxu0
      %v238 = vpop.f32.mrf.mxu0
      %v239 = vadd.f32 0.0, %v238
      %v240 = vpop.f32.mrf.mxu0
      %241 = vdwg.mxu0
      %vm242 = vcmask 261120
      %243 = vst.msk [vmem:[%s179] sm:$0xff] %vm242, %v236
      %244 = vst.msk [vmem:[%s179 + $0x8] sm:$0xff] %vm242, %v239
      %v245 = vsel %vm242, %v236, 0.0
      %v246 = vsel %vm242, %v239, 0.0
      %v247 = vadd.f32 %v245, %v246
      %v248 = vrot.slane %v247, 4
      %v249 = vadd.f32 %v247, %v248
      %v250 = vrot.slane %v249, 2
      %v251 = vadd.f32 %v249, %v250
      %v252 = vrot.slane %v251, 1
      %v253 = vadd.f32 %v251, %v252
      %v254 = vmul.f32 %v236, %v236
      %v255 = vmul.f32 %v239, %v239
      %v256 = vsel %vm242, %v254, 0.0
      %v257 = vsel %vm242, %v255, 0.0
      %v258 = vadd.f32 %v256, %v257
      %v259 = vrot.slane %v258, 4
      %v260 = vadd.f32 %v258, %v259
      %v261 = vrot.slane %v260, 2
      %v262 = vadd.f32 %v260, %v261
      %v263 = vrot.slane %v262, 1
      %v264 = vadd.f32 %v262, %v263
      %vm265 = vcmask 1040384
      %v266 = vsel %vm265, %v253, %v264
      %vm267 = vcmask 254976
      %268 = vst.msk [vmem:[%s184] sm:$0x3] %vm267, %v266
      %s269 = smul.u32 2, %s15
      %p270 = scmp.lt.s32.totalorder %s269, 7
      %s271 = scalar_select %p270, %s269, 7
      %s272 = smul.addr %s271, 8
      %s273 = scalar_lea.vmem %s2, %s272
      %p274 = scmp.lt.s32.totalorder %s15, 3
      %s275 = scalar_select %p274, %s15, 3
      %s276 = smul.addr %s275, 2
      %s277 = scalar_lea.vmem %s3, %s276
      // Predicated region
      $region29: #{_lambda_.4} parent=27 // pred_check
        %p278 = pneg %p80
      $region30: #{_lambda_.4} parent=27 // pred_check_branch
        %280 = sbr.rel (%p278) target = $region32
      $region31: #{_lambda_.4} parent=27 // pred_region
        %s281 = smul.u32 2, %s15
      $region32: #{_lambda_.4} parent=27 // pred_fallthru
        _
      // Predicated region
      $region33: #{_lambda_.4} parent=27 // pred_check
        %p282 = pneg %p106
      $region34: #{_lambda_.4} parent=27 // pred_check_branch
        %284 = sbr.rel (%p282) target = $region36
      $region35: #{_lambda_.4} parent=27 // pred_region
        _
      $region36: #{_lambda_.4} parent=27 // pred_fallthru
        _
    $region28: #{_lambda_.4} parent=5 // pred_fallthru
      _
    %p285 = scmp.le.s32.totalorder 2, %s10
    // Predicated region
    $region37: #{_lambda_.4} parent=5 // pred_check
      %p286 = pneg %p285
    $region38: #{_lambda_.4} parent=5 // pred_check_branch
      %288 = sbr.rel (%p286) target = $region40
    $region39: #{_lambda_.4} parent=5 // pred_region
      %s289 = ssub.s32 %s10, 2
      // Predicated region
      $region41: #{_lambda_.4} parent=39 // pred_check
        %p290 = pneg %p86
      $region42: #{_lambda_.4} parent=39 // pred_check_branch
        %292 = sbr.rel (%p290) target = $region44
      $region43: #{_lambda_.4} parent=39 // pred_region
        %s293 = smul.u32 2, %s16
        %p294 = scmp.lt.s32.totalorder %s293, 7
        %s295 = scalar_select %p294, %s293, 7
        %s296 = smul.addr %s295, 8
        %s297 = scalar_lea.vmem %s2, %s296
      $region44: #{_lambda_.4} parent=39 // pred_fallthru
        _
      // Predicated region
      $region45: #{_lambda_.4} parent=39 // pred_check
        %p298 = pneg %p112
      $region46: #{_lambda_.4} parent=39 // pred_check_branch
        %300 = sbr.rel (%p298) target = $region48
      $region47: #{_lambda_.4} parent=39 // pred_region
        %p301 = scmp.lt.s32.totalorder %s16, 3
        %s302 = scalar_select %p301, %s16, 3
        %s303 = smul.addr %s302, 2
        %s304 = scalar_lea.vmem %s3, %s303
      $region48: #{_lambda_.4} parent=39 // pred_fallthru
        _
    $region40: #{_lambda_.4} parent=5 // pred_fallthru
      _
  $region6: #{_lambda_.4} parent=0 // loop_footer
    %s14 = sadd.s32 1, %s10
  $region7: #{_lambda_.4} parent=0 // loop_footer_branch
    %9 = sbr.rel target = $region3
  $region8: #{_lambda_.4} parent=0 // loop_exit
    _

// kernel: _lambda_.6
$region0: #{_lambda_.6}
  #allocation0 [shape = 'u32[]', space=smem, size = 0x4, offset = 0x4, fixed_abs, tag = 'smem constant byte address 0x4 - core index']
  #allocation1 [shape = 'u32[144,128]{1,0:T(1,128)}', space=vmem, size = 0x12000, scoped, tag = 'internal scratch']
  %s0 = inlined_call_operand.vmem [shape: f32[64,32], index: 0, kind: input, shape index: {}]
  %s1 = inlined_call_operand.vmem [shape: f32[1,32], index: 1, kind: input, shape index: {}]
  %s2 = inlined_call_operand.vmem [shape: f32[1,32], index: 2, kind: input, shape index: {}]
  %s3 = inlined_call_operand.vmem [shape: f32[64,1], index: 3, kind: input, shape index: {}]
  %s4 = inlined_call_operand.vmem [shape: bf16[32,16], index: 4, kind: input, shape index: {}]
  %s5 = inlined_call_operand.vmem [shape: f32[64,16], index: 5, kind: output, shape index: {0}]
  %s6 = inlined_call_operand.vmem [shape: f32[4,2,16], index: 6, kind: output, shape index: {1}]
  %7 = xla_tuple %s5, %s6
  %s8 = sld [smem:[#allocation0]]
  $region61: #{_lambda_.6} parent=0
    _
  %s10 = ssub.s32 1, %s8
  %s11 = scalar_select 0, %s10, %s8
  loop: start=0, step=1, limit=6
  $region2: #{_lambda_.6} parent=0 // loop_pre_header
    _
  $region3: #{_lambda_.6} parent=0 // loop_header
    %s13 = sphi 0, %s17
    %p14 = scmp.ge.s32.totalorder %s13, 6
    %s23 = sphi 0, %s25
    %s26 = sphi 0, %s23
    %s27 = sphi 0, %s26
    %s43 = sphi 0, %s27
    %s47 = sphi 0, %s47
    %s49 = sphi 0, %s47
    %s50 = sphi 0, %s49
    %s64 = sphi 0, %s50
    %s68 = sphi 0, %s68
    %s70 = sphi 0, %s68
    %s71 = sphi 0, %s70
    %s85 = sphi 0, %s71
    %s91 = sphi 0, %s93
    %s94 = sphi 0, %s91
    %s95 = sphi 0, %s94
    %s111 = sphi 0, %s95
    %s115 = sphi 0, %s115
    %s117 = sphi 0, %s115
    %s118 = sphi 0, %s117
    %s132 = sphi 0, %s118
    %s138 = sphi 0, %s140
    %s141 = sphi 0, %s138
    %s142 = sphi 0, %s141
    %s158 = sphi 0, %s142
    %s164 = sphi 0, %s166
    %s167 = sphi 0, %s164
    %s168 = sphi 0, %s167
    %s184 = sphi 0, %s168
  $region4: #{_lambda_.6} parent=0 // loop_header_branch
    %16 = sbr.rel (%p14) target = $region8
  $region5: #{_lambda_.6} parent=0 // loop_body
    %s18 = ssub.s32 %s13, 1
    %s19 = ssub.s32 %s13, 2
    %s20 = sadd.s32 %s13, 1
    %s21 = ssub.s32 %s13, %s20
    %p22 = scmp.eq.s32.totalorder %s21, 0
    %s24 = sadd.s32 %s23, 1
    %s25 = scalar_select %p22, %s23, %s24
    %p28 = pneg %p22
    %p29 = scmp.eq.s32.totalorder %s13, 3
    %p30 = por %p28, %p29
    %p31 = scmp.ne.s32.totalorder %s23, %s26
    %p32 = scmp.eq.s32.totalorder %s13, 0
    %p33 = por %p31, %p32
    %p34 = scmp.ne.s32.totalorder %s23, %s26
    %p35 = scmp.eq.s32.totalorder %s18, 3
    %p36 = por %p34, %p35
    %p37 = scmp.ne.s32.totalorder %s26, %s27
    %p38 = scmp.eq.s32.totalorder %s18, 0
    %p39 = por %p37, %p38
    %p40 = scmp.ne.s32.totalorder %s26, %s27
    %p41 = scmp.eq.s32.totalorder %s19, 3
    %p42 = por %p40, %p41
    %p44 = scmp.ne.s32.totalorder %s27, %s43
    %p45 = scmp.eq.s32.totalorder %s19, 0
    %p46 = por %p44, %p45
    %s48 = sadd.s32 %s47, 1
    %p51 = scmp.eq.s32.totalorder %s13, 3
    %p52 = scmp.ne.s32.totalorder %s47, %s49
    %p53 = scmp.eq.s32.totalorder %s13, 0
    %p54 = por %p52, %p53
    %p55 = scmp.ne.s32.totalorder %s47, %s49
    %p56 = scmp.eq.s32.totalorder %s18, 3
    %p57 = por %p55, %p56
    %p58 = scmp.ne.s32.totalorder %s49, %s50
    %p59 = scmp.eq.s32.totalorder %s18, 0
    %p60 = por %p58, %p59
    %p61 = scmp.ne.s32.totalorder %s49, %s50
    %p62 = scmp.eq.s32.totalorder %s19, 3
    %p63 = por %p61, %p62
    %p65 = scmp.ne.s32.totalorder %s50, %s64
    %p66 = scmp.eq.s32.totalorder %s19, 0
    %p67 = por %p65, %p66
    %s69 = sadd.s32 %s68, 1
    %p72 = scmp.eq.s32.totalorder %s13, 3
    %p73 = scmp.ne.s32.totalorder %s68, %s70
    %p74 = scmp.eq.s32.totalorder %s13, 0
    %p75 = por %p73, %p74
    %p76 = scmp.ne.s32.totalorder %s68, %s70
    %p77 = scmp.eq.s32.totalorder %s18, 3
    %p78 = por %p76, %p77
    %p79 = scmp.ne.s32.totalorder %s70, %s71
    %p80 = scmp.eq.s32.totalorder %s18, 0
    %p81 = por %p79, %p80
    %p82 = scmp.ne.s32.totalorder %s70, %s71
    %p83 = scmp.eq.s32.totalorder %s19, 3
    %p84 = por %p82, %p83
    %p86 = scmp.ne.s32.totalorder %s71, %s85
    %p87 = scmp.eq.s32.totalorder %s19, 0
    %p88 = por %p86, %p87
    %s89 = ssub.s32 %s13, %s20
    %p90 = scmp.eq.s32.totalorder %s89, 0
    %s92 = sadd.s32 %s91, 1
    %s93 = scalar_select %p90, %s91, %s92
    %p96 = pneg %p90
    %p97 = scmp.eq.s32.totalorder %s13, 3
    %p98 = por %p96, %p97
    %p99 = scmp.ne.s32.totalorder %s91, %s94
    %p100 = scmp.eq.s32.totalorder %s13, 0
    %p101 = por %p99, %p100
    %p102 = scmp.ne.s32.totalorder %s91, %s94
    %p103 = scmp.eq.s32.totalorder %s18, 3
    %p104 = por %p102, %p103
    %p105 = scmp.ne.s32.totalorder %s94, %s95
    %p106 = scmp.eq.s32.totalorder %s18, 0
    %p107 = por %p105, %p106
    %p108 = scmp.ne.s32.totalorder %s94, %s95
    %p109 = scmp.eq.s32.totalorder %s19, 3
    %p110 = por %p108, %p109
    %p112 = scmp.ne.s32.totalorder %s95, %s111
    %p113 = scmp.eq.s32.totalorder %s19, 0
    %p114 = por %p112, %p113
    %s116 = sadd.s32 %s115, 1
    %p119 = scmp.eq.s32.totalorder %s13, 3
    %p120 = scmp.ne.s32.totalorder %s115, %s117
    %p121 = scmp.eq.s32.totalorder %s13, 0
    %p122 = por %p120, %p121
    %p123 = scmp.ne.s32.totalorder %s115, %s117
    %p124 = scmp.eq.s32.totalorder %s18, 3
    %p125 = por %p123, %p124
    %p126 = scmp.ne.s32.totalorder %s117, %s118
    %p127 = scmp.eq.s32.totalorder %s18, 0
    %p128 = por %p126, %p127
    %p129 = scmp.ne.s32.totalorder %s117, %s118
    %p130 = scmp.eq.s32.totalorder %s19, 3
    %p131 = por %p129, %p130
    %p133 = scmp.ne.s32.totalorder %s118, %s132
    %p134 = scmp.eq.s32.totalorder %s19, 0
    %p135 = por %p133, %p134
    %s136 = ssub.s32 %s13, %s20
    %p137 = scmp.eq.s32.totalorder %s136, 0
    %s139 = sadd.s32 %s138, 1
    %s140 = scalar_select %p137, %s138, %s139
    %p143 = pneg %p137
    %p144 = scmp.eq.s32.totalorder %s13, 3
    %p145 = por %p143, %p144
    %p146 = scmp.ne.s32.totalorder %s138, %s141
    %p147 = scmp.eq.s32.totalorder %s13, 0
    %p148 = por %p146, %p147
    %p149 = scmp.ne.s32.totalorder %s138, %s141
    %p150 = scmp.eq.s32.totalorder %s18, 3
    %p151 = por %p149, %p150
    %p152 = scmp.ne.s32.totalorder %s141, %s142
    %p153 = scmp.eq.s32.totalorder %s18, 0
    %p154 = por %p152, %p153
    %p155 = scmp.ne.s32.totalorder %s141, %s142
    %p156 = scmp.eq.s32.totalorder %s19, 3
    %p157 = por %p155, %p156
    %p159 = scmp.ne.s32.totalorder %s142, %s158
    %p160 = scmp.eq.s32.totalorder %s19, 0
    %p161 = por %p159, %p160
    %s162 = ssub.s32 %s13, %s20
    %p163 = scmp.eq.s32.totalorder %s162, 0
    %s165 = sadd.s32 %s164, 1
    %s166 = scalar_select %p163, %s164, %s165
    %p169 = pneg %p163
    %p170 = scmp.eq.s32.totalorder %s13, 3
    %p171 = por %p169, %p170
    %p172 = scmp.ne.s32.totalorder %s164, %s167
    %p173 = scmp.eq.s32.totalorder %s13, 0
    %p174 = por %p172, %p173
    %p175 = scmp.ne.s32.totalorder %s164, %s167
    %p176 = scmp.eq.s32.totalorder %s18, 3
    %p177 = por %p175, %p176
    %p178 = scmp.ne.s32.totalorder %s167, %s168
    %p179 = scmp.eq.s32.totalorder %s18, 0
    %p180 = por %p178, %p179
    %p181 = scmp.ne.s32.totalorder %s167, %s168
    %p182 = scmp.eq.s32.totalorder %s19, 3
    %p183 = por %p181, %p182
    %p185 = scmp.ne.s32.totalorder %s168, %s184
    %p186 = scmp.eq.s32.totalorder %s19, 0
    %p187 = por %p185, %p186
    %p188 = scmp.le.s32.totalorder 1, %s13
    %p189 = scmp.lt.s32.totalorder %s13, 5
    %p190 = pnand %p188, %p189
    %p191 = pneg %p190
    // Predicated region
    $region9: #{_lambda_.6} parent=5 // pred_check
      _
    $region10: #{_lambda_.6} parent=5 // pred_check_branch
      %193 = sbr.rel (%p190) target = $region12
    $region11: #{_lambda_.6} parent=5 // pred_region
      %s194 = ssub.s32 %s13, 1
      // Predicated region
      $region13: #{_lambda_.6} parent=11 // pred_check
        %p195 = pneg %p60
      $region14: #{_lambda_.6} parent=11 // pred_check_branch
        %197 = sbr.rel (%p195) target = $region16
      $region15: #{_lambda_.6} parent=11 // pred_region
        _
      $region16: #{_lambda_.6} parent=11 // pred_fallthru
        _
      // Predicated region
      $region17: #{_lambda_.6} parent=11 // pred_check
        %p198 = pneg %p81
      $region18: #{_lambda_.6} parent=11 // pred_check_branch
        %200 = sbr.rel (%p198) target = $region20
      $region19: #{_lambda_.6} parent=11 // pred_region
        _
      $region20: #{_lambda_.6} parent=11 // pred_fallthru
        _
      // Predicated region
      $region21: #{_lambda_.6} parent=11 // pred_check
        %p201 = pneg %p128
      $region22: #{_lambda_.6} parent=11 // pred_check_branch
        %203 = sbr.rel (%p201) target = $region24
      $region23: #{_lambda_.6} parent=11 // pred_region
        _
      $region24: #{_lambda_.6} parent=11 // pred_fallthru
        _
    $region12: #{_lambda_.6} parent=5 // pred_fallthru
      _
    %p204 = scmp.lt.s32.totalorder %s13, 4
    // Predicated region
    $region25: #{_lambda_.6} parent=5 // pred_check
      %p205 = pneg %p204
    $region26: #{_lambda_.6} parent=5 // pred_check_branch
      %207 = sbr.rel (%p205) target = $region28
    $region27: #{_lambda_.6} parent=5 // pred_region
      // Predicated region
      $region29: #{_lambda_.6} parent=27 // pred_check
        %p208 = pneg %p33
      $region30: #{_lambda_.6} parent=27 // pred_check_branch
        %210 = sbr.rel (%p208) target = $region32
      $region31: #{_lambda_.6} parent=27 // pred_region
        %s211 = smul.u32 2, %s13
        %p212 = scmp.lt.s32.totalorder %s211, 7
        %s213 = scalar_select %p212, %s211, 7
        %s214 = smul.addr %s213, 8
        %s215 = scalar_lea.vmem %s0, %s214
        %s216 = smul.u32 2, %s13
      $region32: #{_lambda_.6} parent=27 // pred_fallthru
        _
      // Predicated region
      $region33: #{_lambda_.6} parent=27 // pred_check
        %p217 = pneg %p101
      $region34: #{_lambda_.6} parent=27 // pred_check_branch
        %219 = sbr.rel (%p217) target = $region36
      $region35: #{_lambda_.6} parent=27 // pred_region
        %s220 = smul.u32 2, %s13
        %p221 = scmp.lt.s32.totalorder %s220, 7
        %s222 = scalar_select %p221, %s220, 7
        %s223 = smul.addr %s222, 8
        %s224 = scalar_lea.vmem %s3, %s223
        %s225 = smul.u32 2, %s13
      $region36: #{_lambda_.6} parent=27 // pred_fallthru
        _
    $region28: #{_lambda_.6} parent=5 // pred_fallthru
      _
    %p226 = scmp.le.s32.totalorder 1, %s13
    %p227 = scmp.lt.s32.totalorder %s13, 5
    %p228 = pnand %p226, %p227
    %p229 = pneg %p228
    // Predicated region
    $region37: #{_lambda_.6} parent=5 // pred_check
      _
    $region38: #{_lambda_.6} parent=5 // pred_check_branch
      %231 = sbr.rel (%p228) target = $region40
    $region39: #{_lambda_.6} parent=5 // pred_region
      %s232 = ssub.s32 %s13, 1
      %s233 = smul.u32 2, %s18
      %p234 = scmp.lt.s32.totalorder %s233, 7
      %s235 = scalar_select %p234, %s233, 7
      %s236 = smul.addr %s235, 8
      %s237 = scalar_lea.vmem %s0, %s236
      %p238 = pneg %p39
      %p239 = pneg %p36
      %p240 = pneg %p60
      %p241 = pneg %p57
      %p242 = pneg %p81
      %p243 = pneg %p78
      %s244 = smul.u32 2, %s18
      %p245 = scmp.lt.s32.totalorder %s244, 7
      %s246 = scalar_select %p245, %s244, 7
      %s247 = smul.addr %s246, 8
      %s248 = scalar_lea.vmem %s3, %s247
      %p249 = pneg %p107
      %p250 = pneg %p104
      %p251 = pneg %p128
      %p252 = pneg %p125
      %p253 = pneg %p154
      %p254 = pneg %p151
      %s255 = smul.u32 2, %s18
      %p256 = scmp.lt.s32.totalorder %s255, 7
      %s257 = scalar_select %p256, %s255, 7
      %s258 = smul.addr %s257, 8
      %s259 = scalar_lea.vmem %s5, %s258
      %p260 = pneg %p180
      %p261 = pneg %p177
      %p262 = scmp.lt.s32.totalorder %s18, 3
      %s263 = scalar_select %p262, %s18, 3
      %s264 = smul.addr %s263, 2
      %s265 = scalar_lea.vmem %s6, %s264
      %s266 = smul.u32 2, %s18
      %p267 = scmp.lt.s32.totalorder %s266, 7
      %s268 = scalar_select %p267, %s266, 7
      %s269 = smul.addr %s268, 8
      %s270 = scalar_lea.vmem %s0, %s269
      %s271 = smul.u32 2, %s18
      %s272 = smul.u32 2, %s18
      %p273 = scmp.lt.s32.totalorder %s272, 7
      %s274 = scalar_select %p273, %s272, 7
      %s275 = smul.addr %s274, 8
      %s276 = scalar_lea.vmem %s3, %s275
      %s277 = smul.u32 2, %s18
      %s278 = smul.u32 2, %s18
      %p279 = scmp.lt.s32.totalorder %s278, 7
      %s280 = scalar_select %p279, %s278, 7
      %s281 = smul.addr %s280, 8
      %s282 = scalar_lea.vmem %s5, %s281
      %s283 = smul.u32 2, %s18
      %p284 = scmp.lt.s32.totalorder %s18, 3
      %s285 = scalar_select %p284, %s18, 3
      %s286 = smul.addr %s285, 2
      %s287 = scalar_lea.vmem %s6, %s286
      %v289 = vld [vmem:[%s270] sm:$0xff]
      %v290 = vld [vmem:[%s270 + $0x8] sm:$0xff]
      %v291 = vld [vmem:[%s1] sm:$0x1]
      %v293 = vlaneseq
      %v294 = vshrl.u32 %v293, 7
      %v295 = vsub.s32 0, %v294
      %v296 = vrot.slane %v291, %v295
      %v298 = vmul.f32 %v289, %v296
      %v299 = vmul.f32 %v290, %v296
      %v300 = vld [vmem:[%s2] sm:$0x1]
      %v302 = vlaneseq
      %v303 = vshrl.u32 %v302, 7
      %v304 = vsub.s32 0, %v303
      %v305 = vrot.slane %v300, %v304
      %v307 = vadd.f32 %v298, %v305
      %v308 = vadd.f32 %v299, %v305
      %v309 = vmax.f32 %v307, 0.0
      %v310 = vmax.f32 %v308, 0.0
      %v311 = vld [vmem:[%s276] sm:$0xff]
      %v312 = vld [vmem:[%s276 + $0x8] sm:$0xff]
      %314 = vset.pattern.permute.xlu0 0
      %315 = vperm.xlu0 %314, %v311
      %v316 = vpop.permute.xlu0 %315
      %319 = vset.pattern.permute.xlu0 0
      %320 = vperm.xlu0 %319, %v312
      %v321 = vpop.permute.xlu0 %320
      %v323 = vmul.f32 %v309, %v316
      %v324 = vmul.f32 %v310, %v321
      %v325 = vpack.c.bf16 %v324, %v323
      %v326 = vld [vmem:[%s4] sm:$0xf]
      %v327 = vld [vmem:[%s4 + $0x4] sm:$0xf]
      %v328 = vld [vmem:[%s4 + $0x8] sm:$0xf]
      %v329 = vld [vmem:[%s4 + $0xc] sm:$0xf]
      %v334 = vunpack.c.l.b16 %v326
      %v335 = vunpack.c.l.b16 %v327
      %v336 = vunpack.c.l.b16 %v328
      %v337 = vunpack.c.l.b16 %v329
      %v338 = vpack.c.b16 %v335, %v334
      %v339 = vpack.c.b16 %v337, %v336
      %vm342 = vcmask 261120
      %v344 = vsel %vm342, %v325, 0
      %346 = vmatprep.subr.bf16.mxu0 0
      %347 = vmatpush1.bf16.msra.mxu0 0
      %348 = vmatprep.subr.bf16.mxu0 0
      %349 = vmatpush1.bf16.msra.mxu0 0
      %350 = vmatprep.subr.bf16.mxu0 0
      %351 = vmatpush1.bf16.msra.mxu0 0
      %352 = vmatprep.subr.bf16.mxu0 0
      %353 = vmatpush1.bf16.msra.mxu0 0
      %354 = vmatprep.subr.bf16.mxu0 0
      %355 = vmatpush1.bf16.msra.mxu0 0
      %356 = vmatprep.subr.bf16.mxu0 0
      %357 = vmatpush1.bf16.msra.mxu0 0
      %358 = vmatprep.subr.bf16.mxu0 0
      %359 = vmatpush1.bf16.msra.mxu0 %v339
      %360 = vmatprep.subr.bf16.mxu0 0
      %361 = vmatpush1.bf16.msra.mxu0 %v338
      %362 = vmatprep.subr.bf16.mxu0 0
      %363 = vmatpush2.bf16.msra.mxu0 0
      %364 = vmatprep.subr.bf16.mxu0 0
      %365 = vmatpush2.bf16.msra.mxu0 0
      %366 = vmatprep.subr.bf16.mxu0 0
      %367 = vmatpush2.bf16.msra.mxu0 0
      %368 = vmatprep.subr.bf16.mxu0 0
      %369 = vmatpush2.bf16.msra.mxu0 0
      %370 = vmatprep.subr.bf16.mxu0 0
      %371 = vmatpush2.bf16.msra.mxu0 0
      %372 = vmatprep.subr.bf16.mxu0 0
      %373 = vmatpush2.bf16.msra.mxu0 0
      %374 = vmatprep.subr.bf16.mxu0 0
      %375 = vmatpush2.bf16.msra.mxu0 0
      %376 = vmatprep.subr.bf16.mxu0 0
      %377 = vmatpush2.bf16.msra.mxu0 0
      %378 = vmatprep.mubr.bf16.mxu0 0
      %379 = vmatmul.mubr.bf16.gmra.mxu0 %v344
      %v380 = vpop.f32.mrf.mxu0
      %v381 = vadd.f32 0.0, %v380
      %v382 = vpop.f32.mrf.mxu0
      %v383 = vpop.f32.mrf.mxu0
      %v384 = vadd.f32 0.0, %v383
      %v385 = vpop.f32.mrf.mxu0
      %386 = vdwg.mxu0
      %vm387 = vcmask 130048
      %388 = vst.msk [vmem:[%s282] sm:$0xff] %vm387, %v381
      %389 = vst.msk [vmem:[%s282 + $0x8] sm:$0xff] %vm387, %v384
      %v390 = vsel %vm387, %v381, 0.0
      %v391 = vsel %vm387, %v384, 0.0
      %v392 = vadd.f32 %v390, %v391
      %v393 = vrot.slane %v392, 4
      %v394 = vadd.f32 %v392, %v393
      %v395 = vrot.slane %v394, 2
      %v396 = vadd.f32 %v394, %v395
      %v397 = vrot.slane %v396, 1
      %v398 = vadd.f32 %v396, %v397
      %v399 = vmul.f32 %v381, %v381
      %v400 = vmul.f32 %v384, %v384
      %v401 = vsel %vm387, %v399, 0.0
      %v402 = vsel %vm387, %v400, 0.0
      %v403 = vadd.f32 %v401, %v402
      %v404 = vrot.slane %v403, 4
      %v405 = vadd.f32 %v403, %v404
      %v406 = vrot.slane %v405, 2
      %v407 = vadd.f32 %v405, %v406
      %v408 = vrot.slane %v407, 1
      %v409 = vadd.f32 %v407, %v408
      %vm410 = vcmask 1040384
      %v411 = vsel %vm410, %v398, %v409
      %vm412 = vcmask 123904
      %413 = vst.msk [vmem:[%s287] sm:$0x3] %vm412, %v411
      %s414 = smul.u32 2, %s18
      %p415 = scmp.lt.s32.totalorder %s414, 7
      %s416 = scalar_select %p415, %s414, 7
      %s417 = smul.addr %s416, 8
      %s418 = scalar_lea.vmem %s5, %s417
      %p419 = scmp.lt.s32.totalorder %s18, 3
      %s420 = scalar_select %p419, %s18, 3
      %s421 = smul.addr %s420, 2
      %s422 = scalar_lea.vmem %s6, %s421
      // Predicated region
      $region41: #{_lambda_.6} parent=39 // pred_check
        %p423 = pneg %p151
      $region42: #{_lambda_.6} parent=39 // pred_check_branch
        %425 = sbr.rel (%p423) target = $region44
      $region43: #{_lambda_.6} parent=39 // pred_region
        %s426 = smul.u32 2, %s18
      $region44: #{_lambda_.6} parent=39 // pred_fallthru
        _
      // Predicated region
      $region45: #{_lambda_.6} parent=39 // pred_check
        %p427 = pneg %p177
      $region46: #{_lambda_.6} parent=39 // pred_check_branch
        %429 = sbr.rel (%p427) target = $region48
      $region47: #{_lambda_.6} parent=39 // pred_region
        _
      $region48: #{_lambda_.6} parent=39 // pred_fallthru
        _
    $region40: #{_lambda_.6} parent=5 // pred_fallthru
      _
    %p430 = scmp.le.s32.totalorder 2, %s13
    // Predicated region
    $region49: #{_lambda_.6} parent=5 // pred_check
      %p431 = pneg %p430
    $region50: #{_lambda_.6} parent=5 // pred_check_branch
      %433 = sbr.rel (%p431) target = $region52
    $region51: #{_lambda_.6} parent=5 // pred_region
      %s434 = ssub.s32 %s13, 2
      // Predicated region
      $region53: #{_lambda_.6} parent=51 // pred_check
        %p435 = pneg %p157
      $region54: #{_lambda_.6} parent=51 // pred_check_branch
        %437 = sbr.rel (%p435) target = $region56
      $region55: #{_lambda_.6} parent=51 // pred_region
        %s438 = smul.u32 2, %s19
        %p439 = scmp.lt.s32.totalorder %s438, 7
        %s440 = scalar_select %p439, %s438, 7
        %s441 = smul.addr %s440, 8
        %s442 = scalar_lea.vmem %s5, %s441
      $region56: #{_lambda_.6} parent=51 // pred_fallthru
        _
      // Predicated region
      $region57: #{_lambda_.6} parent=51 // pred_check
        %p443 = pneg %p183
      $region58: #{_lambda_.6} parent=51 // pred_check_branch
        %445 = sbr.rel (%p443) target = $region60
      $region59: #{_lambda_.6} parent=51 // pred_region
        %p446 = scmp.lt.s32.totalorder %s19, 3
        %s447 = scalar_select %p446, %s19, 3
        %s448 = smul.addr %s447, 2
        %s449 = scalar_lea.vmem %s6, %s448
      $region60: #{_lambda_.6} parent=51 // pred_fallthru
        _
    $region52: #{_lambda_.6} parent=5 // pred_fallthru
      _
  $region6: #{_lambda_.6} parent=0 // loop_footer
    %s17 = sadd.s32 1, %s13
  $region7: #{_lambda_.6} parent=0 // loop_footer_branch
    %12 = sbr.rel target = $region3
  $region8: #{_lambda_.6} parent=0 // loop_exit
    _

// kernel: _lambda_.5
$region0: #{_lambda_.5}
  #allocation0 [shape = 'u32[]', space=smem, size = 0x4, offset = 0x4, fixed_abs, tag = 'smem constant byte address 0x4 - core index']
  #allocation1 [shape = 'u32[144,128]{1,0:T(1,128)}', space=vmem, size = 0x12000, scoped, tag = 'internal scratch']
  %s0 = inlined_call_operand.vmem [shape: f32[64,32], index: 0, kind: input, shape index: {}]
  %s1 = inlined_call_operand.vmem [shape: f32[1,32], index: 1, kind: input, shape index: {}]
  %s2 = inlined_call_operand.vmem [shape: f32[1,32], index: 2, kind: input, shape index: {}]
  %s3 = inlined_call_operand.vmem [shape: f32[64,1], index: 3, kind: input, shape index: {}]
  %s4 = inlined_call_operand.vmem [shape: bf16[32,32], index: 4, kind: input, shape index: {}]
  %s5 = inlined_call_operand.vmem [shape: f32[64,32], index: 5, kind: output, shape index: {0}]
  %s6 = inlined_call_operand.vmem [shape: f32[4,2,32], index: 6, kind: output, shape index: {1}]
  %7 = xla_tuple %s5, %s6
  %s8 = sld [smem:[#allocation0]]
  $region61: #{_lambda_.5} parent=0
    _
  %s10 = ssub.s32 1, %s8
  %s11 = scalar_select 0, %s10, %s8
  loop: start=0, step=1, limit=6
  $region2: #{_lambda_.5} parent=0 // loop_pre_header
    _
  $region3: #{_lambda_.5} parent=0 // loop_header
    %s13 = sphi 0, %s17
    %p14 = scmp.ge.s32.totalorder %s13, 6
    %s23 = sphi 0, %s25
    %s26 = sphi 0, %s23
    %s27 = sphi 0, %s26
    %s43 = sphi 0, %s27
    %s47 = sphi 0, %s47
    %s49 = sphi 0, %s47
    %s50 = sphi 0, %s49
    %s64 = sphi 0, %s50
    %s68 = sphi 0, %s68
    %s70 = sphi 0, %s68
    %s71 = sphi 0, %s70
    %s85 = sphi 0, %s71
    %s91 = sphi 0, %s93
    %s94 = sphi 0, %s91
    %s95 = sphi 0, %s94
    %s111 = sphi 0, %s95
    %s115 = sphi 0, %s115
    %s117 = sphi 0, %s115
    %s118 = sphi 0, %s117
    %s132 = sphi 0, %s118
    %s138 = sphi 0, %s140
    %s141 = sphi 0, %s138
    %s142 = sphi 0, %s141
    %s158 = sphi 0, %s142
    %s164 = sphi 0, %s166
    %s167 = sphi 0, %s164
    %s168 = sphi 0, %s167
    %s184 = sphi 0, %s168
  $region4: #{_lambda_.5} parent=0 // loop_header_branch
    %16 = sbr.rel (%p14) target = $region8
  $region5: #{_lambda_.5} parent=0 // loop_body
    %s18 = ssub.s32 %s13, 1
    %s19 = ssub.s32 %s13, 2
    %s20 = sadd.s32 %s13, 1
    %s21 = ssub.s32 %s13, %s20
    %p22 = scmp.eq.s32.totalorder %s21, 0
    %s24 = sadd.s32 %s23, 1
    %s25 = scalar_select %p22, %s23, %s24
    %p28 = pneg %p22
    %p29 = scmp.eq.s32.totalorder %s13, 3
    %p30 = por %p28, %p29
    %p31 = scmp.ne.s32.totalorder %s23, %s26
    %p32 = scmp.eq.s32.totalorder %s13, 0
    %p33 = por %p31, %p32
    %p34 = scmp.ne.s32.totalorder %s23, %s26
    %p35 = scmp.eq.s32.totalorder %s18, 3
    %p36 = por %p34, %p35
    %p37 = scmp.ne.s32.totalorder %s26, %s27
    %p38 = scmp.eq.s32.totalorder %s18, 0
    %p39 = por %p37, %p38
    %p40 = scmp.ne.s32.totalorder %s26, %s27
    %p41 = scmp.eq.s32.totalorder %s19, 3
    %p42 = por %p40, %p41
    %p44 = scmp.ne.s32.totalorder %s27, %s43
    %p45 = scmp.eq.s32.totalorder %s19, 0
    %p46 = por %p44, %p45
    %s48 = sadd.s32 %s47, 1
    %p51 = scmp.eq.s32.totalorder %s13, 3
    %p52 = scmp.ne.s32.totalorder %s47, %s49
    %p53 = scmp.eq.s32.totalorder %s13, 0
    %p54 = por %p52, %p53
    %p55 = scmp.ne.s32.totalorder %s47, %s49
    %p56 = scmp.eq.s32.totalorder %s18, 3
    %p57 = por %p55, %p56
    %p58 = scmp.ne.s32.totalorder %s49, %s50
    %p59 = scmp.eq.s32.totalorder %s18, 0
    %p60 = por %p58, %p59
    %p61 = scmp.ne.s32.totalorder %s49, %s50
    %p62 = scmp.eq.s32.totalorder %s19, 3
    %p63 = por %p61, %p62
    %p65 = scmp.ne.s32.totalorder %s50, %s64
    %p66 = scmp.eq.s32.totalorder %s19, 0
    %p67 = por %p65, %p66
    %s69 = sadd.s32 %s68, 1
    %p72 = scmp.eq.s32.totalorder %s13, 3
    %p73 = scmp.ne.s32.totalorder %s68, %s70
    %p74 = scmp.eq.s32.totalorder %s13, 0
    %p75 = por %p73, %p74
    %p76 = scmp.ne.s32.totalorder %s68, %s70
    %p77 = scmp.eq.s32.totalorder %s18, 3
    %p78 = por %p76, %p77
    %p79 = scmp.ne.s32.totalorder %s70, %s71
    %p80 = scmp.eq.s32.totalorder %s18, 0
    %p81 = por %p79, %p80
    %p82 = scmp.ne.s32.totalorder %s70, %s71
    %p83 = scmp.eq.s32.totalorder %s19, 3
    %p84 = por %p82, %p83
    %p86 = scmp.ne.s32.totalorder %s71, %s85
    %p87 = scmp.eq.s32.totalorder %s19, 0
    %p88 = por %p86, %p87
    %s89 = ssub.s32 %s13, %s20
    %p90 = scmp.eq.s32.totalorder %s89, 0
    %s92 = sadd.s32 %s91, 1
    %s93 = scalar_select %p90, %s91, %s92
    %p96 = pneg %p90
    %p97 = scmp.eq.s32.totalorder %s13, 3
    %p98 = por %p96, %p97
    %p99 = scmp.ne.s32.totalorder %s91, %s94
    %p100 = scmp.eq.s32.totalorder %s13, 0
    %p101 = por %p99, %p100
    %p102 = scmp.ne.s32.totalorder %s91, %s94
    %p103 = scmp.eq.s32.totalorder %s18, 3
    %p104 = por %p102, %p103
    %p105 = scmp.ne.s32.totalorder %s94, %s95
    %p106 = scmp.eq.s32.totalorder %s18, 0
    %p107 = por %p105, %p106
    %p108 = scmp.ne.s32.totalorder %s94, %s95
    %p109 = scmp.eq.s32.totalorder %s19, 3
    %p110 = por %p108, %p109
    %p112 = scmp.ne.s32.totalorder %s95, %s111
    %p113 = scmp.eq.s32.totalorder %s19, 0
    %p114 = por %p112, %p113
    %s116 = sadd.s32 %s115, 1
    %p119 = scmp.eq.s32.totalorder %s13, 3
    %p120 = scmp.ne.s32.totalorder %s115, %s117
    %p121 = scmp.eq.s32.totalorder %s13, 0
    %p122 = por %p120, %p121
    %p123 = scmp.ne.s32.totalorder %s115, %s117
    %p124 = scmp.eq.s32.totalorder %s18, 3
    %p125 = por %p123, %p124
    %p126 = scmp.ne.s32.totalorder %s117, %s118
    %p127 = scmp.eq.s32.totalorder %s18, 0
    %p128 = por %p126, %p127
    %p129 = scmp.ne.s32.totalorder %s117, %s118
    %p130 = scmp.eq.s32.totalorder %s19, 3
    %p131 = por %p129, %p130
    %p133 = scmp.ne.s32.totalorder %s118, %s132
    %p134 = scmp.eq.s32.totalorder %s19, 0
    %p135 = por %p133, %p134
    %s136 = ssub.s32 %s13, %s20
    %p137 = scmp.eq.s32.totalorder %s136, 0
    %s139 = sadd.s32 %s138, 1
    %s140 = scalar_select %p137, %s138, %s139
    %p143 = pneg %p137
    %p144 = scmp.eq.s32.totalorder %s13, 3
    %p145 = por %p143, %p144
    %p146 = scmp.ne.s32.totalorder %s138, %s141
    %p147 = scmp.eq.s32.totalorder %s13, 0
    %p148 = por %p146, %p147
    %p149 = scmp.ne.s32.totalorder %s138, %s141
    %p150 = scmp.eq.s32.totalorder %s18, 3
    %p151 = por %p149, %p150
    %p152 = scmp.ne.s32.totalorder %s141, %s142
    %p153 = scmp.eq.s32.totalorder %s18, 0
    %p154 = por %p152, %p153
    %p155 = scmp.ne.s32.totalorder %s141, %s142
    %p156 = scmp.eq.s32.totalorder %s19, 3
    %p157 = por %p155, %p156
    %p159 = scmp.ne.s32.totalorder %s142, %s158
    %p160 = scmp.eq.s32.totalorder %s19, 0
    %p161 = por %p159, %p160
    %s162 = ssub.s32 %s13, %s20
    %p163 = scmp.eq.s32.totalorder %s162, 0
    %s165 = sadd.s32 %s164, 1
    %s166 = scalar_select %p163, %s164, %s165
    %p169 = pneg %p163
    %p170 = scmp.eq.s32.totalorder %s13, 3
    %p171 = por %p169, %p170
    %p172 = scmp.ne.s32.totalorder %s164, %s167
    %p173 = scmp.eq.s32.totalorder %s13, 0
    %p174 = por %p172, %p173
    %p175 = scmp.ne.s32.totalorder %s164, %s167
    %p176 = scmp.eq.s32.totalorder %s18, 3
    %p177 = por %p175, %p176
    %p178 = scmp.ne.s32.totalorder %s167, %s168
    %p179 = scmp.eq.s32.totalorder %s18, 0
    %p180 = por %p178, %p179
    %p181 = scmp.ne.s32.totalorder %s167, %s168
    %p182 = scmp.eq.s32.totalorder %s19, 3
    %p183 = por %p181, %p182
    %p185 = scmp.ne.s32.totalorder %s168, %s184
    %p186 = scmp.eq.s32.totalorder %s19, 0
    %p187 = por %p185, %p186
    %p188 = scmp.le.s32.totalorder 1, %s13
    %p189 = scmp.lt.s32.totalorder %s13, 5
    %p190 = pnand %p188, %p189
    %p191 = pneg %p190
    // Predicated region
    $region9: #{_lambda_.5} parent=5 // pred_check
      _
    $region10: #{_lambda_.5} parent=5 // pred_check_branch
      %193 = sbr.rel (%p190) target = $region12
    $region11: #{_lambda_.5} parent=5 // pred_region
      %s194 = ssub.s32 %s13, 1
      // Predicated region
      $region13: #{_lambda_.5} parent=11 // pred_check
        %p195 = pneg %p60
      $region14: #{_lambda_.5} parent=11 // pred_check_branch
        %197 = sbr.rel (%p195) target = $region16
      $region15: #{_lambda_.5} parent=11 // pred_region
        _
      $region16: #{_lambda_.5} parent=11 // pred_fallthru
        _
      // Predicated region
      $region17: #{_lambda_.5} parent=11 // pred_check
        %p198 = pneg %p81
      $region18: #{_lambda_.5} parent=11 // pred_check_branch
        %200 = sbr.rel (%p198) target = $region20
      $region19: #{_lambda_.5} parent=11 // pred_region
        _
      $region20: #{_lambda_.5} parent=11 // pred_fallthru
        _
      // Predicated region
      $region21: #{_lambda_.5} parent=11 // pred_check
        %p201 = pneg %p128
      $region22: #{_lambda_.5} parent=11 // pred_check_branch
        %203 = sbr.rel (%p201) target = $region24
      $region23: #{_lambda_.5} parent=11 // pred_region
        _
      $region24: #{_lambda_.5} parent=11 // pred_fallthru
        _
    $region12: #{_lambda_.5} parent=5 // pred_fallthru
      _
    %p204 = scmp.lt.s32.totalorder %s13, 4
    // Predicated region
    $region25: #{_lambda_.5} parent=5 // pred_check
      %p205 = pneg %p204
    $region26: #{_lambda_.5} parent=5 // pred_check_branch
      %207 = sbr.rel (%p205) target = $region28
    $region27: #{_lambda_.5} parent=5 // pred_region
      // Predicated region
      $region29: #{_lambda_.5} parent=27 // pred_check
        %p208 = pneg %p33
      $region30: #{_lambda_.5} parent=27 // pred_check_branch
        %210 = sbr.rel (%p208) target = $region32
      $region31: #{_lambda_.5} parent=27 // pred_region
        %s211 = smul.u32 2, %s13
        %p212 = scmp.lt.s32.totalorder %s211, 7
        %s213 = scalar_select %p212, %s211, 7
        %s214 = smul.addr %s213, 8
        %s215 = scalar_lea.vmem %s0, %s214
        %s216 = smul.u32 2, %s13
      $region32: #{_lambda_.5} parent=27 // pred_fallthru
        _
      // Predicated region
      $region33: #{_lambda_.5} parent=27 // pred_check
        %p217 = pneg %p101
      $region34: #{_lambda_.5} parent=27 // pred_check_branch
        %219 = sbr.rel (%p217) target = $region36
      $region35: #{_lambda_.5} parent=27 // pred_region
        %s220 = smul.u32 2, %s13
        %p221 = scmp.lt.s32.totalorder %s220, 7
        %s222 = scalar_select %p221, %s220, 7
        %s223 = smul.addr %s222, 8
        %s224 = scalar_lea.vmem %s3, %s223
        %s225 = smul.u32 2, %s13
      $region36: #{_lambda_.5} parent=27 // pred_fallthru
        _
    $region28: #{_lambda_.5} parent=5 // pred_fallthru
      _
    %p226 = scmp.le.s32.totalorder 1, %s13
    %p227 = scmp.lt.s32.totalorder %s13, 5
    %p228 = pnand %p226, %p227
    %p229 = pneg %p228
    // Predicated region
    $region37: #{_lambda_.5} parent=5 // pred_check
      _
    $region38: #{_lambda_.5} parent=5 // pred_check_branch
      %231 = sbr.rel (%p228) target = $region40
    $region39: #{_lambda_.5} parent=5 // pred_region
      %s232 = ssub.s32 %s13, 1
      %s233 = smul.u32 2, %s18
      %p234 = scmp.lt.s32.totalorder %s233, 7
      %s235 = scalar_select %p234, %s233, 7
      %s236 = smul.addr %s235, 8
      %s237 = scalar_lea.vmem %s0, %s236
      %p238 = pneg %p39
      %p239 = pneg %p36
      %p240 = pneg %p60
      %p241 = pneg %p57
      %p242 = pneg %p81
      %p243 = pneg %p78
      %s244 = smul.u32 2, %s18
      %p245 = scmp.lt.s32.totalorder %s244, 7
      %s246 = scalar_select %p245, %s244, 7
      %s247 = smul.addr %s246, 8
      %s248 = scalar_lea.vmem %s3, %s247
      %p249 = pneg %p107
      %p250 = pneg %p104
      %p251 = pneg %p128
      %p252 = pneg %p125
      %p253 = pneg %p154
      %p254 = pneg %p151
      %s255 = smul.u32 2, %s18
      %p256 = scmp.lt.s32.totalorder %s255, 7
      %s257 = scalar_select %p256, %s255, 7
      %s258 = smul.addr %s257, 8
      %s259 = scalar_lea.vmem %s5, %s258
      %p260 = pneg %p180
      %p261 = pneg %p177
      %p262 = scmp.lt.s32.totalorder %s18, 3
      %s263 = scalar_select %p262, %s18, 3
      %s264 = smul.addr %s263, 2
      %s265 = scalar_lea.vmem %s6, %s264
      %s266 = smul.u32 2, %s18
      %p267 = scmp.lt.s32.totalorder %s266, 7
      %s268 = scalar_select %p267, %s266, 7
      %s269 = smul.addr %s268, 8
      %s270 = scalar_lea.vmem %s0, %s269
      %s271 = smul.u32 2, %s18
      %s272 = smul.u32 2, %s18
      %p273 = scmp.lt.s32.totalorder %s272, 7
      %s274 = scalar_select %p273, %s272, 7
      %s275 = smul.addr %s274, 8
      %s276 = scalar_lea.vmem %s3, %s275
      %s277 = smul.u32 2, %s18
      %s278 = smul.u32 2, %s18
      %p279 = scmp.lt.s32.totalorder %s278, 7
      %s280 = scalar_select %p279, %s278, 7
      %s281 = smul.addr %s280, 8
      %s282 = scalar_lea.vmem %s5, %s281
      %s283 = smul.u32 2, %s18
      %p284 = scmp.lt.s32.totalorder %s18, 3
      %s285 = scalar_select %p284, %s18, 3
      %s286 = smul.addr %s285, 2
      %s287 = scalar_lea.vmem %s6, %s286
      %v289 = vld [vmem:[%s270] sm:$0xff]
      %v290 = vld [vmem:[%s270 + $0x8] sm:$0xff]
      %v291 = vld [vmem:[%s1] sm:$0x1]
      %v293 = vlaneseq
      %v294 = vshrl.u32 %v293, 7
      %v295 = vsub.s32 0, %v294
      %v296 = vrot.slane %v291, %v295
      %v298 = vmul.f32 %v289, %v296
      %v299 = vmul.f32 %v290, %v296
      %v300 = vld [vmem:[%s2] sm:$0x1]
      %v302 = vlaneseq
      %v303 = vshrl.u32 %v302, 7
      %v304 = vsub.s32 0, %v303
      %v305 = vrot.slane %v300, %v304
      %v307 = vadd.f32 %v298, %v305
      %v308 = vadd.f32 %v299, %v305
      %v309 = vmax.f32 %v307, 0.0
      %v310 = vmax.f32 %v308, 0.0
      %v311 = vld [vmem:[%s276] sm:$0xff]
      %v312 = vld [vmem:[%s276 + $0x8] sm:$0xff]
      %314 = vset.pattern.permute.xlu0 0
      %315 = vperm.xlu0 %314, %v311
      %v316 = vpop.permute.xlu0 %315
      %319 = vset.pattern.permute.xlu0 0
      %320 = vperm.xlu0 %319, %v312
      %v321 = vpop.permute.xlu0 %320
      %v323 = vmul.f32 %v309, %v316
      %v324 = vmul.f32 %v310, %v321
      %v325 = vpack.c.bf16 %v324, %v323
      %v326 = vld [vmem:[%s4] sm:$0xf]
      %v327 = vld [vmem:[%s4 + $0x4] sm:$0xf]
      %v328 = vld [vmem:[%s4 + $0x8] sm:$0xf]
      %v329 = vld [vmem:[%s4 + $0xc] sm:$0xf]
      %v334 = vunpack.c.l.b16 %v326
      %v335 = vunpack.c.l.b16 %v327
      %v336 = vunpack.c.l.b16 %v328
      %v337 = vunpack.c.l.b16 %v329
      %v338 = vpack.c.b16 %v335, %v334
      %v339 = vpack.c.b16 %v337, %v336
      %vm342 = vcmask 261120
      %v344 = vsel %vm342, %v325, 0
      %346 = vmatprep.subr.bf16.mxu0 0
      %347 = vmatpush1.bf16.msra.mxu0 0
      %348 = vmatprep.subr.bf16.mxu0 0
      %349 = vmatpush1.bf16.msra.mxu0 0
      %350 = vmatprep.subr.bf16.mxu0 0
      %351 = vmatpush1.bf16.msra.mxu0 0
      %352 = vmatprep.subr.bf16.mxu0 0
      %353 = vmatpush1.bf16.msra.mxu0 0
      %354 = vmatprep.subr.bf16.mxu0 0
      %355 = vmatpush1.bf16.msra.mxu0 0
      %356 = vmatprep.subr.bf16.mxu0 0
      %357 = vmatpush1.bf16.msra.mxu0 0
      %358 = vmatprep.subr.bf16.mxu0 0
      %359 = vmatpush1.bf16.msra.mxu0 %v339
      %360 = vmatprep.subr.bf16.mxu0 0
      %361 = vmatpush1.bf16.msra.mxu0 %v338
      %362 = vmatprep.subr.bf16.mxu0 0
      %363 = vmatpush2.bf16.msra.mxu0 0
      %364 = vmatprep.subr.bf16.mxu0 0
      %365 = vmatpush2.bf16.msra.mxu0 0
      %366 = vmatprep.subr.bf16.mxu0 0
      %367 = vmatpush2.bf16.msra.mxu0 0
      %368 = vmatprep.subr.bf16.mxu0 0
      %369 = vmatpush2.bf16.msra.mxu0 0
      %370 = vmatprep.subr.bf16.mxu0 0
      %371 = vmatpush2.bf16.msra.mxu0 0
      %372 = vmatprep.subr.bf16.mxu0 0
      %373 = vmatpush2.bf16.msra.mxu0 0
      %374 = vmatprep.subr.bf16.mxu0 0
      %375 = vmatpush2.bf16.msra.mxu0 0
      %376 = vmatprep.subr.bf16.mxu0 0
      %377 = vmatpush2.bf16.msra.mxu0 0
      %378 = vmatprep.mubr.bf16.mxu0 0
      %379 = vmatmul.mubr.bf16.gmra.mxu0 %v344
      %v380 = vpop.f32.mrf.mxu0
      %v381 = vadd.f32 0.0, %v380
      %v382 = vpop.f32.mrf.mxu0
      %v383 = vpop.f32.mrf.mxu0
      %v384 = vadd.f32 0.0, %v383
      %v385 = vpop.f32.mrf.mxu0
      %386 = vdwg.mxu0
      %387 = vst.msk [vmem:[%s282] sm:$0xff] %vm342, %v381
      %388 = vst.msk [vmem:[%s282 + $0x8] sm:$0xff] %vm342, %v384
      %v389 = vsel %vm342, %v381, 0.0
      %v390 = vsel %vm342, %v384, 0.0
      %v391 = vadd.f32 %v389, %v390
      %v392 = vrot.slane %v391, 4
      %v393 = vadd.f32 %v391, %v392
      %v394 = vrot.slane %v393, 2
      %v395 = vadd.f32 %v393, %v394
      %v396 = vrot.slane %v395, 1
      %v397 = vadd.f32 %v395, %v396
      %v398 = vmul.f32 %v381, %v381
      %v399 = vmul.f32 %v384, %v384
      %v400 = vsel %vm342, %v398, 0.0
      %v401 = vsel %vm342, %v399, 0.0
      %v402 = vadd.f32 %v400, %v401
      %v403 = vrot.slane %v402, 4
      %v404 = vadd.f32 %v402, %v403
      %v405 = vrot.slane %v404, 2
      %v406 = vadd.f32 %v404, %v405
      %v407 = vrot.slane %v406, 1
      %v408 = vadd.f32 %v406, %v407
      %vm409 = vcmask 1040384
      %v410 = vsel %vm409, %v397, %v408
      %vm411 = vcmask 254976
      %412 = vst.msk [vmem:[%s287] sm:$0x3] %vm411, %v410
      %s413 = smul.u32 2, %s18
      %p414 = scmp.lt.s32.totalorder %s413, 7
      %s415 = scalar_select %p414, %s413, 7
      %s416 = smul.addr %s415, 8
      %s417 = scalar_lea.vmem %s5, %s416
      %p418 = scmp.lt.s32.totalorder %s18, 3
      %s419 = scalar_select %p418, %s18, 3
      %s420 = smul.addr %s419, 2
      %s421 = scalar_lea.vmem %s6, %s420
      // Predicated region
      $region41: #{_lambda_.5} parent=39 // pred_check
        %p422 = pneg %p151
      $region42: #{_lambda_.5} parent=39 // pred_check_branch
        %424 = sbr.rel (%p422) target = $region44
      $region43: #{_lambda_.5} parent=39 // pred_region
        %s425 = smul.u32 2, %s18
      $region44: #{_lambda_.5} parent=39 // pred_fallthru
        _
      // Predicated region
      $region45: #{_lambda_.5} parent=39 // pred_check
        %p426 = pneg %p177
      $region46: #{_lambda_.5} parent=39 // pred_check_branch
        %428 = sbr.rel (%p426) target = $region48
      $region47: #{_lambda_.5} parent=39 // pred_region
        _
      $region48: #{_lambda_.5} parent=39 // pred_fallthru
        _
    $region40: #{_lambda_.5} parent=5 // pred_fallthru
      _
    %p429 = scmp.le.s32.totalorder 2, %s13
    // Predicated region
    $region49: #{_lambda_.5} parent=5 // pred_check
      %p430 = pneg %p429
    $region50: #{_lambda_.5} parent=5 // pred_check_branch
      %432 = sbr.rel (%p430) target = $region52
    $region51: #{_lambda_.5} parent=5 // pred_region
      %s433 = ssub.s32 %s13, 2
      // Predicated region
      $region53: #{_lambda_.5} parent=51 // pred_check
        %p434 = pneg %p157
      $region54: #{_lambda_.5} parent=51 // pred_check_branch
        %436 = sbr.rel (%p434) target = $region56
      $region55: #{_lambda_.5} parent=51 // pred_region
        %s437 = smul.u32 2, %s19
        %p438 = scmp.lt.s32.totalorder %s437, 7
        %s439 = scalar_select %p438, %s437, 7
        %s440 = smul.addr %s439, 8
        %s441 = scalar_lea.vmem %s5, %s440
      $region56: #{_lambda_.5} parent=51 // pred_fallthru
        _
      // Predicated region
      $region57: #{_lambda_.5} parent=51 // pred_check
        %p442 = pneg %p183
      $region58: #{_lambda_.5} parent=51 // pred_check_branch
        %444 = sbr.rel (%p442) target = $region60
      $region59: #{_lambda_.5} parent=51 // pred_region
        %p445 = scmp.lt.s32.totalorder %s19, 3
        %s446 = scalar_select %p445, %s19, 3
        %s447 = smul.addr %s446, 2
        %s448 = scalar_lea.vmem %s6, %s447
      $region60: #{_lambda_.5} parent=51 // pred_fallthru
        _
    $region52: #{_lambda_.5} parent=5 // pred_fallthru
      _
  $region6: #{_lambda_.5} parent=0 // loop_footer
    %s17 = sadd.s32 1, %s13
  $region7: #{_lambda_.5} parent=0 // loop_footer_branch
    %12 = sbr.rel target = $region3
  $region8: #{_lambda_.5} parent=0 // loop_exit
    _

// kernel: _lambda_.7
$region0: #{_lambda_.7}
  #allocation0 [shape = 'u32[]', space=smem, size = 0x4, offset = 0x4, fixed_abs, tag = 'smem constant byte address 0x4 - core index']
  #allocation1 [shape = 'u32[144,128]{1,0:T(1,128)}', space=vmem, size = 0x12000, scoped, tag = 'internal scratch']
  #allocation2 [shape = 'f32[1]{0:T(128)S(6)}', space=smem, size = 0x200, scoped, tag = 'scoped memory for _lambda_.7']
  %s0 = inlined_call_operand.vmem [shape: f32[64,16], index: 0, kind: input, shape index: {}]
  %s1 = inlined_call_operand.vmem [shape: f32[1,16], index: 1, kind: input, shape index: {}]
  %s2 = inlined_call_operand.vmem [shape: f32[1,16], index: 2, kind: input, shape index: {}]
  %s3 = inlined_call_operand.vmem [shape: f32[1,16], index: 3, kind: input, shape index: {}]
  %s4 = inlined_call_operand.<no memory space> [shape: f32[1], index: 4, kind: input, shape index: {}]
  %s5 = inlined_call_operand.vmem [shape: f32[64,1], index: 5, kind: output, shape index: {}]
  %s6 = sld [smem:[#allocation0]]
  $region53: #{_lambda_.7} parent=0
    _
  %s8 = ssub.s32 1, %s6
  %s9 = scalar_select 0, %s8, %s6
  %10 = sst [smem:[#allocation2]] %s4
  loop: start=0, step=1, limit=6
  $region2: #{_lambda_.7} parent=0 // loop_pre_header
    _
  $region3: #{_lambda_.7} parent=0 // loop_header
    %s12 = sphi 0, %s16
    %p13 = scmp.ge.s32.totalorder %s12, 6
    %s22 = sphi 0, %s24
    %s25 = sphi 0, %s22
    %s26 = sphi 0, %s25
    %s42 = sphi 0, %s26
    %s46 = sphi 0, %s46
    %s48 = sphi 0, %s46
    %s49 = sphi 0, %s48
    %s63 = sphi 0, %s49
    %s67 = sphi 0, %s67
    %s69 = sphi 0, %s67
    %s70 = sphi 0, %s69
    %s84 = sphi 0, %s70
    %s88 = sphi 0, %s88
    %s90 = sphi 0, %s88
    %s91 = sphi 0, %s90
    %s105 = sphi 0, %s91
    %s109 = sphi 0, %s109
    %s111 = sphi 0, %s109
    %s112 = sphi 0, %s111
    %s126 = sphi 0, %s112
    %s132 = sphi 0, %s134
    %s135 = sphi 0, %s132
    %s136 = sphi 0, %s135
    %s152 = sphi 0, %s136
  $region4: #{_lambda_.7} parent=0 // loop_header_branch
    %15 = sbr.rel (%p13) target = $region8
  $region5: #{_lambda_.7} parent=0 // loop_body
    %s17 = ssub.s32 %s12, 1
    %s18 = ssub.s32 %s12, 2
    %s19 = sadd.s32 %s12, 1
    %s20 = ssub.s32 %s12, %s19
    %p21 = scmp.eq.s32.totalorder %s20, 0
    %s23 = sadd.s32 %s22, 1
    %s24 = scalar_select %p21, %s22, %s23
    %p27 = pneg %p21
    %p28 = scmp.eq.s32.totalorder %s12, 3
    %p29 = por %p27, %p28
    %p30 = scmp.ne.s32.totalorder %s22, %s25
    %p31 = scmp.eq.s32.totalorder %s12, 0
    %p32 = por %p30, %p31
    %p33 = scmp.ne.s32.totalorder %s22, %s25
    %p34 = scmp.eq.s32.totalorder %s17, 3
    %p35 = por %p33, %p34
    %p36 = scmp.ne.s32.totalorder %s25, %s26
    %p37 = scmp.eq.s32.totalorder %s17, 0
    %p38 = por %p36, %p37
    %p39 = scmp.ne.s32.totalorder %s25, %s26
    %p40 = scmp.eq.s32.totalorder %s18, 3
    %p41 = por %p39, %p40
    %p43 = scmp.ne.s32.totalorder %s26, %s42
    %p44 = scmp.eq.s32.totalorder %s18, 0
    %p45 = por %p43, %p44
    %s47 = sadd.s32 %s46, 1
    %p50 = scmp.eq.s32.totalorder %s12, 3
    %p51 = scmp.ne.s32.totalorder %s46, %s48
    %p52 = scmp.eq.s32.totalorder %s12, 0
    %p53 = por %p51, %p52
    %p54 = scmp.ne.s32.totalorder %s46, %s48
    %p55 = scmp.eq.s32.totalorder %s17, 3
    %p56 = por %p54, %p55
    %p57 = scmp.ne.s32.totalorder %s48, %s49
    %p58 = scmp.eq.s32.totalorder %s17, 0
    %p59 = por %p57, %p58
    %p60 = scmp.ne.s32.totalorder %s48, %s49
    %p61 = scmp.eq.s32.totalorder %s18, 3
    %p62 = por %p60, %p61
    %p64 = scmp.ne.s32.totalorder %s49, %s63
    %p65 = scmp.eq.s32.totalorder %s18, 0
    %p66 = por %p64, %p65
    %s68 = sadd.s32 %s67, 1
    %p71 = scmp.eq.s32.totalorder %s12, 3
    %p72 = scmp.ne.s32.totalorder %s67, %s69
    %p73 = scmp.eq.s32.totalorder %s12, 0
    %p74 = por %p72, %p73
    %p75 = scmp.ne.s32.totalorder %s67, %s69
    %p76 = scmp.eq.s32.totalorder %s17, 3
    %p77 = por %p75, %p76
    %p78 = scmp.ne.s32.totalorder %s69, %s70
    %p79 = scmp.eq.s32.totalorder %s17, 0
    %p80 = por %p78, %p79
    %p81 = scmp.ne.s32.totalorder %s69, %s70
    %p82 = scmp.eq.s32.totalorder %s18, 3
    %p83 = por %p81, %p82
    %p85 = scmp.ne.s32.totalorder %s70, %s84
    %p86 = scmp.eq.s32.totalorder %s18, 0
    %p87 = por %p85, %p86
    %s89 = sadd.s32 %s88, 1
    %p92 = scmp.eq.s32.totalorder %s12, 3
    %p93 = scmp.ne.s32.totalorder %s88, %s90
    %p94 = scmp.eq.s32.totalorder %s12, 0
    %p95 = por %p93, %p94
    %p96 = scmp.ne.s32.totalorder %s88, %s90
    %p97 = scmp.eq.s32.totalorder %s17, 3
    %p98 = por %p96, %p97
    %p99 = scmp.ne.s32.totalorder %s90, %s91
    %p100 = scmp.eq.s32.totalorder %s17, 0
    %p101 = por %p99, %p100
    %p102 = scmp.ne.s32.totalorder %s90, %s91
    %p103 = scmp.eq.s32.totalorder %s18, 3
    %p104 = por %p102, %p103
    %p106 = scmp.ne.s32.totalorder %s91, %s105
    %p107 = scmp.eq.s32.totalorder %s18, 0
    %p108 = por %p106, %p107
    %s110 = sadd.s32 %s109, 1
    %p113 = scmp.eq.s32.totalorder %s12, 3
    %p114 = scmp.ne.s32.totalorder %s109, %s111
    %p115 = scmp.eq.s32.totalorder %s12, 0
    %p116 = por %p114, %p115
    %p117 = scmp.ne.s32.totalorder %s109, %s111
    %p118 = scmp.eq.s32.totalorder %s17, 3
    %p119 = por %p117, %p118
    %p120 = scmp.ne.s32.totalorder %s111, %s112
    %p121 = scmp.eq.s32.totalorder %s17, 0
    %p122 = por %p120, %p121
    %p123 = scmp.ne.s32.totalorder %s111, %s112
    %p124 = scmp.eq.s32.totalorder %s18, 3
    %p125 = por %p123, %p124
    %p127 = scmp.ne.s32.totalorder %s112, %s126
    %p128 = scmp.eq.s32.totalorder %s18, 0
    %p129 = por %p127, %p128
    %s130 = ssub.s32 %s12, %s19
    %p131 = scmp.eq.s32.totalorder %s130, 0
    %s133 = sadd.s32 %s132, 1
    %s134 = scalar_select %p131, %s132, %s133
    %p137 = pneg %p131
    %p138 = scmp.eq.s32.totalorder %s12, 3
    %p139 = por %p137, %p138
    %p140 = scmp.ne.s32.totalorder %s132, %s135
    %p141 = scmp.eq.s32.totalorder %s12, 0
    %p142 = por %p140, %p141
    %p143 = scmp.ne.s32.totalorder %s132, %s135
    %p144 = scmp.eq.s32.totalorder %s17, 3
    %p145 = por %p143, %p144
    %p146 = scmp.ne.s32.totalorder %s135, %s136
    %p147 = scmp.eq.s32.totalorder %s17, 0
    %p148 = por %p146, %p147
    %p149 = scmp.ne.s32.totalorder %s135, %s136
    %p150 = scmp.eq.s32.totalorder %s18, 3
    %p151 = por %p149, %p150
    %p153 = scmp.ne.s32.totalorder %s136, %s152
    %p154 = scmp.eq.s32.totalorder %s18, 0
    %p155 = por %p153, %p154
    %p156 = scmp.le.s32.totalorder 1, %s12
    %p157 = scmp.lt.s32.totalorder %s12, 5
    %p158 = pnand %p156, %p157
    %p159 = pneg %p158
    // Predicated region
    $region9: #{_lambda_.7} parent=5 // pred_check
      _
    $region10: #{_lambda_.7} parent=5 // pred_check_branch
      %161 = sbr.rel (%p158) target = $region12
    $region11: #{_lambda_.7} parent=5 // pred_region
      %s162 = ssub.s32 %s12, 1
      // Predicated region
      $region13: #{_lambda_.7} parent=11 // pred_check
        %p163 = pneg %p59
      $region14: #{_lambda_.7} parent=11 // pred_check_branch
        %165 = sbr.rel (%p163) target = $region16
      $region15: #{_lambda_.7} parent=11 // pred_region
        _
      $region16: #{_lambda_.7} parent=11 // pred_fallthru
        _
      // Predicated region
      $region17: #{_lambda_.7} parent=11 // pred_check
        %p166 = pneg %p80
      $region18: #{_lambda_.7} parent=11 // pred_check_branch
        %168 = sbr.rel (%p166) target = $region20
      $region19: #{_lambda_.7} parent=11 // pred_region
        _
      $region20: #{_lambda_.7} parent=11 // pred_fallthru
        _
      // Predicated region
      $region21: #{_lambda_.7} parent=11 // pred_check
        %p169 = pneg %p101
      $region22: #{_lambda_.7} parent=11 // pred_check_branch
        %171 = sbr.rel (%p169) target = $region24
      $region23: #{_lambda_.7} parent=11 // pred_region
        _
      $region24: #{_lambda_.7} parent=11 // pred_fallthru
        _
      // Predicated region
      $region25: #{_lambda_.7} parent=11 // pred_check
        %p172 = pneg %p122
      $region26: #{_lambda_.7} parent=11 // pred_check_branch
        %174 = sbr.rel (%p172) target = $region28
      $region27: #{_lambda_.7} parent=11 // pred_region
        _
      $region28: #{_lambda_.7} parent=11 // pred_fallthru
        _
    $region12: #{_lambda_.7} parent=5 // pred_fallthru
      _
    %p175 = scmp.lt.s32.totalorder %s12, 4
    // Predicated region
    $region29: #{_lambda_.7} parent=5 // pred_check
      %p176 = pneg %p175
    $region30: #{_lambda_.7} parent=5 // pred_check_branch
      %178 = sbr.rel (%p176) target = $region32
    $region31: #{_lambda_.7} parent=5 // pred_region
      // Predicated region
      $region33: #{_lambda_.7} parent=31 // pred_check
        %p179 = pneg %p32
      $region34: #{_lambda_.7} parent=31 // pred_check_branch
        %181 = sbr.rel (%p179) target = $region36
      $region35: #{_lambda_.7} parent=31 // pred_region
        %s182 = smul.u32 2, %s12
        %p183 = scmp.lt.s32.totalorder %s182, 7
        %s184 = scalar_select %p183, %s182, 7
        %s185 = smul.addr %s184, 8
        %s186 = scalar_lea.vmem %s0, %s185
        %s187 = smul.u32 2, %s12
      $region36: #{_lambda_.7} parent=31 // pred_fallthru
        _
    $region32: #{_lambda_.7} parent=5 // pred_fallthru
      _
    %p188 = scmp.le.s32.totalorder 1, %s12
    %p189 = scmp.lt.s32.totalorder %s12, 5
    %p190 = pnand %p188, %p189
    %p191 = pneg %p190
    // Predicated region
    $region37: #{_lambda_.7} parent=5 // pred_check
      _
    $region38: #{_lambda_.7} parent=5 // pred_check_branch
      %193 = sbr.rel (%p190) target = $region40
    $region39: #{_lambda_.7} parent=5 // pred_region
      %s194 = ssub.s32 %s12, 1
      %s195 = smul.u32 2, %s17
      %p196 = scmp.lt.s32.totalorder %s195, 7
      %s197 = scalar_select %p196, %s195, 7
      %s198 = smul.addr %s197, 8
      %s199 = scalar_lea.vmem %s0, %s198
      %p200 = pneg %p38
      %p201 = pneg %p35
      %p202 = pneg %p59
      %p203 = pneg %p56
      %p204 = pneg %p80
      %p205 = pneg %p77
      %p206 = pneg %p101
      %p207 = pneg %p98
      %p208 = pneg %p122
      %p209 = pneg %p119
      %p210 = pneg %p148
      %p211 = pneg %p145
      %s212 = smul.u32 2, %s17
      %p213 = scmp.lt.s32.totalorder %s212, 7
      %s214 = scalar_select %p213, %s212, 7
      %s215 = smul.addr %s214, 8
      %s216 = scalar_lea.vmem %s5, %s215
      %s217 = smul.u32 2, %s17
      %p218 = scmp.lt.s32.totalorder %s217, 7
      %s219 = scalar_select %p218, %s217, 7
      %s220 = smul.addr %s219, 8
      %s221 = scalar_lea.vmem %s0, %s220
      %s222 = smul.u32 2, %s17
      %s223 = smul.u32 2, %s17
      %p224 = scmp.lt.s32.totalorder %s223, 7
      %s225 = scalar_select %p224, %s223, 7
      %s226 = smul.addr %s225, 8
      %s227 = scalar_lea.vmem %s5, %s226
      %s228 = smul.u32 2, %s17
      %v229 = vld [vmem:[%s221] sm:$0xff]
      %v230 = vld [vmem:[%s221 + $0x8] sm:$0xff]
      %v231 = vld [vmem:[%s1] sm:$0x1]
      %v233 = vlaneseq
      %v234 = vshrl.u32 %v233, 7
      %v235 = vsub.s32 0, %v234
      %v236 = vrot.slane %v231, %v235
      %v238 = vmul.f32 %v229, %v236
      %v239 = vmul.f32 %v230, %v236
      %v240 = vld [vmem:[%s2] sm:$0x1]
      %v242 = vlaneseq
      %v243 = vshrl.u32 %v242, 7
      %v244 = vsub.s32 0, %v243
      %v245 = vrot.slane %v240, %v244
      %v247 = vadd.f32 %v238, %v245
      %v248 = vadd.f32 %v239, %v245
      %v249 = vmax.f32 %v247, 0.0
      %v250 = vmax.f32 %v248, 0.0
      %v251 = vld [vmem:[%s3] sm:$0x1]
      %v253 = vlaneseq
      %v254 = vshrl.u32 %v253, 7
      %v255 = vsub.s32 0, %v254
      %v256 = vrot.slane %v251, %v255
      %v258 = vmul.f32 %v249, %v256
      %v259 = vmul.f32 %v250, %v256
      %vm260 = vcmask 130048
      %v261 = vsel %vm260, %v258, 0.0
      %262 = vadd.xlane.f32.xlu0 %v261
      %v263 = vpop.xlane.xlu0 %262
      %v264 = vsel %vm260, %v259, 0.0
      %265 = vadd.xlane.f32.xlu0 %v264
      %v266 = vpop.xlane.xlu0 %265
      %s267 = sld [smem:[#allocation2]]
      %v268 = vstv %s267
      %v269 = vadd.f32 %v263, %v268
      %v270 = vadd.f32 %v266, %v268
      %vm271 = vcmask 7168
      %272 = vst.msk [vmem:[%s227] sm:$0xff] %vm271, %v269
      %273 = vst.msk [vmem:[%s227 + $0x8] sm:$0xff] %vm271, %v270
      %s274 = smul.u32 2, %s17
      %p275 = scmp.lt.s32.totalorder %s274, 7
      %s276 = scalar_select %p275, %s274, 7
      %s277 = smul.addr %s276, 8
      %s278 = scalar_lea.vmem %s5, %s277
      // Predicated region
      $region41: #{_lambda_.7} parent=39 // pred_check
        %p279 = pneg %p145
      $region42: #{_lambda_.7} parent=39 // pred_check_branch
        %281 = sbr.rel (%p279) target = $region44
      $region43: #{_lambda_.7} parent=39 // pred_region
        %s282 = smul.u32 2, %s17
      $region44: #{_lambda_.7} parent=39 // pred_fallthru
        _
    $region40: #{_lambda_.7} parent=5 // pred_fallthru
      _
    %p283 = scmp.le.s32.totalorder 2, %s12
    // Predicated region
    $region45: #{_lambda_.7} parent=5 // pred_check
      %p284 = pneg %p283
    $region46: #{_lambda_.7} parent=5 // pred_check_branch
      %286 = sbr.rel (%p284) target = $region48
    $region47: #{_lambda_.7} parent=5 // pred_region
      %s287 = ssub.s32 %s12, 2
      // Predicated region
      $region49: #{_lambda_.7} parent=47 // pred_check
        %p288 = pneg %p151
      $region50: #{_lambda_.7} parent=47 // pred_check_branch
        %290 = sbr.rel (%p288) target = $region52
      $region51: #{_lambda_.7} parent=47 // pred_region
        %s291 = smul.u32 2, %s18
        %p292 = scmp.lt.s32.totalorder %s291, 7
        %s293 = scalar_select %p292, %s291, 7
        %s294 = smul.addr %s293, 8
        %s295 = scalar_lea.vmem %s5, %s294
      $region52: #{_lambda_.7} parent=47 // pred_fallthru
        _
    $region48: #{_lambda_.7} parent=5 // pred_fallthru
      _
  $region6: #{_lambda_.7} parent=0 // loop_footer
    %s16 = sadd.s32 1, %s12
  $region7: #{_lambda_.7} parent=0 // loop_footer_branch
    %11 = sbr.rel target = $region3
  $region8: #{_lambda_.7} parent=0 // loop_exit
    _

</llo_original>
